<compile_context>
chip_gen: v5e
topology: v5e:2x2
jax: 0.10.0
libtpu: 0.0.40
codegen_flags: <defaults>
</compile_context>

<pallas_src>
import functools
import math

import jax
import jax.numpy as jnp
from jax import lax
from jax.experimental import pallas as pl
from jax.experimental.pallas import tpu as pltpu

_INV_SQRT_2PI = 1.0 / math.sqrt(2.0 * math.pi)


# --------------------------------------------------------------------------- #
# Kernel
# --------------------------------------------------------------------------- #
def _anomaly_attn_kernel(q_ref, k_ref, v_ref, sp_ref,
                         vout_ref, series_ref, prior_ref,
                         *, scale, mask_flag, heads_per_store, matmul_dtype):
    """One (batch, L-tile) grid step; processes all H heads.

    Ref shapes (leading block dim of 1 kept):
      q_ref      : (1, TL, H*E)   native (B, L, H*E) layout
      k_ref      : (1, S,  H*E)
      v_ref      : (1, S,  H*D)
      sp_ref     : (1, TL, H)     sigma' = 3**(sigmoid(5*sigma)+1e-5) - 1
      vout_ref   : (1, TL, H*D)   written back in native layout
      series_ref : (1, H, TL, S)
      prior_ref  : (1, H, TL, S)
    """
    TL = q_ref.shape[1]
    H = series_ref.shape[1]
    S = series_ref.shape[3]
    E = q_ref.shape[2] // H
    D = v_ref.shape[2] // H

    # Global row/col indices for this L tile (shared across heads).
    row0 = pl.program_id(1) * TL
    row = row0 + lax.broadcasted_iota(jnp.int32, (TL, S), 0)
    col = lax.broadcasted_iota(jnp.int32, (TL, S), 1)
    dist = (row - col).astype(jnp.float32)
    dist2 = dist * dist                                            # (TL, S)
    if mask_flag:
        causal = col > row                                         # (TL, S)

    qk_dnums = (((1,), (1,)), ((), ()))   # contract E of both operands (NT)
    sv_dnums = (((1,), (0,)), ((), ()))   # contract S of series with S of v

    group = []
    for h in range(H):                    # static unroll over heads
        q = q_ref[0, :, h * E:(h + 1) * E].astype(matmul_dtype)    # (TL, E)
        k = k_ref[0, :, h * E:(h + 1) * E].astype(matmul_dtype)    # (S,  E)
        v = v_ref[0, :, h * D:(h + 1) * D].astype(matmul_dtype)    # (S,  D)

        # bf16 operands, f32 accumulation (native MXU path on all gens).
        scores = lax.dot_general(q, k, qk_dnums,
                                 preferred_element_type=jnp.float32)  # (TL,S)
        if mask_flag:
            scores = jnp.where(causal, -jnp.inf, scores)   # mask, then scale
        attn = scores * scale                              # (mirrors reference)

        # Softmax over S (dropout p = 0.0); exact normalization.
        m = jnp.max(attn, axis=-1, keepdims=True)
        e = jnp.exp(attn - m)
        inv_den = 1.0 / jnp.sum(e, axis=-1, keepdims=True)
        series = e * inv_den                                       # (TL, S) f32

        vh = lax.dot_general(series.astype(matmul_dtype), v, sv_dnums,
                             preferred_element_type=jnp.float32)   # (TL, D)
        group.append(vh.astype(vout_ref.dtype))
        if len(group) == heads_per_store:
            # 128-lane-aligned group store (bounds live ranges vs. one big
            # concatenate of all H heads at the end).
            lo = (h + 1 - heads_per_store) * D
            blk = group[0] if heads_per_store == 1 \
                else jnp.concatenate(group, axis=-1)
            vout_ref[0, :, lo:(h + 1) * D] = blk
            group = []

        # Prior: sigma' kept (TL, 1) and broadcast in-expression — the (TL, S)
        # sigma plane is never materialized in the kernel.
        s = sp_ref[0, :, h:h + 1].astype(jnp.float32)              # (TL, 1)
        inv_s = 1.0 / s
        prior = (_INV_SQRT_2PI * inv_s) * jnp.exp(
            -0.5 * dist2 * (inv_s * inv_s))                        # (TL, S)

        series_ref[0, h] = series.astype(series_ref.dtype)
        prior_ref[0, h] = prior.astype(prior_ref.dtype)


# --------------------------------------------------------------------------- #
# Tiling / VMEM planning
# --------------------------------------------------------------------------- #
def _ceil_to(x, m):
    return -(-x // m) * m


def _heads_per_store(H, D):
    """Group heads so each V store is 128-lane aligned when possible."""
    if D % 128 == 0:
        return 1
    if 128 % D == 0 and H % (128 // D) == 0:
        return 128 // D
    return 1


def _blk_bytes(r, c, itemsize):
    return _ceil_to(max(r, 1), 8) * _ceil_to(max(c, 1), 128) * itemsize


def _step_vmem_bytes(tl, S, H, E, D, in_isz, out_isz):
    """Padded VMEM footprint of one grid step's pipeline blocks."""
    b = _blk_bytes(tl, H * E, in_isz)           # q tile
    b += _blk_bytes(S, H * E, in_isz)           # k (full S)
    b += _blk_bytes(S, H * D, in_isz)           # v (full S)
    b += _blk_bytes(tl, H, 4)                   # sigma' (f32)
    b += _blk_bytes(tl, H * D, out_isz)         # V out
    b += 2 * H * _blk_bytes(tl, S, out_isz)     # series + prior out
    return b


def _temp_vmem_bytes(tl, S, D, heads_per_store):
    """In-kernel f32 temporaries (scores/e/series/prior, masks, live vh's)."""
    return 8 * _blk_bytes(tl, S, 4) + (heads_per_store + 1) * _blk_bytes(tl, D, 4)


def _vmem_capacity_bytes():
    try:
        return int(pltpu.get_tpu_info().vmem_capacity_bytes)
    except Exception:
        return 64 * 2 ** 20      # conservative fallback (v7x per-core VMEM)


def _plan_tiling(L, S, H, E, D, *, in_itemsize, out_itemsize,
                 heads_per_store, cap_tl=512):
    """Pick the query tile TL and a vmem_limit_bytes, generation aware."""
    cap = _vmem_capacity_bytes()
    budget = cap - 16 * 2 ** 20          # headroom for compiler scratch

    def need(t):
        return (2 * _step_vmem_bytes(t, S, H, E, D, in_itemsize, out_itemsize)
                + _temp_vmem_bytes(t, S, D, heads_per_store))

    if L <= 8:
        tl = L
    else:
        cands = list(range(8, min(L - 1, cap_tl) + 1, 8))
        if L <= cap_tl:
            cands.append(L)              # full-length block (no ragged edge)
        fitting = [t for t in cands if need(t) <= budget]
        if not fitting:
            tl = 8                       # smallest aligned tile
        else:
            best = max(fitting)
            divs = [t for t in fitting if L % t == 0]
            tl = max(divs) if divs and 2 * max(divs) >= best else best

    limit = int(min(cap - 8 * 2 ** 20,
                    max(32 * 2 ** 20, need(tl) + 4 * 2 ** 20)))
    return tl, limit


# --------------------------------------------------------------------------- #
# Wrapper
# --------------------------------------------------------------------------- #
def anomaly_attention(queries, keys, values, sigma, *, scale=None,
                      mask_flag=True, out_dtype=None,
                      matmul_dtype=jnp.bfloat16, q_tile_cap=512):
    """Pallas implementation of AnomalyAttention.forward (output_attention=True).

    queries: (B, L, H, E)   keys: (B, S, H, E)   values: (B, S, H, D)
    sigma:   (B, L, H)
    returns: V (B, L, H, D), series (B, H, L, S), prior (B, H, L, S),
             sigma_out (B, H, L, S)

    Fast path: pass out_dtype=jnp.bfloat16 — the kernel is HBM-write bound by
    the series/prior planes, so halving them is ~2x wall clock on all gens.
    """
    B, L, H, E = queries.shape
    _, S, _, D = values.shape
    scale = float(scale) if scale is not None else 1.0 / math.sqrt(E)
    out_dtype = jnp.dtype(out_dtype) if out_dtype is not None else queries.dtype

    # Free (contiguous trailing-dim merge) reshapes — no transpose passes.
    q2 = queries.reshape(B, L, H * E)
    k2 = keys.reshape(B, S, H * E)
    v2 = values.reshape(B, S, H * D)

    # sigma' computed once on the tiny (B, L, H) tensor (same ops as the
    # PyTorch module); used in-kernel for the prior and returned broadcast.
    sp = jnp.power(3.0, jax.nn.sigmoid(sigma.astype(jnp.float32) * 5.0)
                   + 1e-5) - 1.0                                   # (B, L, H)

    hps = _heads_per_store(H, D)
    TL, vmem_limit = _plan_tiling(
        L, S, H, E, D,
        in_itemsize=jnp.dtype(queries.dtype).itemsize,
        out_itemsize=out_dtype.itemsize,
        heads_per_store=hps, cap_tl=q_tile_cap)
    n_q = pl.cdiv(L, TL)

    kernel = functools.partial(_anomaly_attn_kernel, scale=scale,
                               mask_flag=mask_flag, heads_per_store=hps,
                               matmul_dtype=matmul_dtype)

    out_shapes = (
        jax.ShapeDtypeStruct((B, L, H * D), out_dtype),    # V (native layout)
        jax.ShapeDtypeStruct((B, H, L, S), out_dtype),     # series
        jax.ShapeDtypeStruct((B, H, L, S), out_dtype),     # prior
    )

    grid_spec = pltpu.PrefetchScalarGridSpec(
        num_scalar_prefetch=0,
        grid=(B, n_q),
        in_specs=[
            pl.BlockSpec((1, TL, H * E), lambda b, qi: (b, qi, 0)),
            pl.BlockSpec((1, S, H * E), lambda b, qi: (b, 0, 0)),   # qi-invariant
            pl.BlockSpec((1, S, H * D), lambda b, qi: (b, 0, 0)),   # qi-invariant
            pl.BlockSpec((1, TL, H), lambda b, qi: (b, qi, 0)),
        ],
        out_specs=[
            pl.BlockSpec((1, TL, H * D), lambda b, qi: (b, qi, 0)),
            pl.BlockSpec((1, H, TL, S), lambda b, qi: (b, 0, qi, 0)),
            pl.BlockSpec((1, H, TL, S), lambda b, qi: (b, 0, qi, 0)),
        ],
    )

    v_flat, series, prior = pl.pallas_call(
        kernel,
        out_shape=out_shapes,
        grid_spec=grid_spec,
        compiler_params=pltpu.CompilerParams(
            dimension_semantics=("parallel", "arbitrary"),
            vmem_limit_bytes=vmem_limit,
        ),
    )(q2, k2, v2, sp)

    V = v_flat.reshape(B, L, H, D)
    # Rank-1 broadcast done OUTSIDE the kernel (fuses with consumers under
    # jit); the kernel never spends HBM writes on the redundant sigma plane.
    sig_bhl = jnp.transpose(sp, (0, 2, 1)).astype(out_dtype)       # (B, H, L)
    sigma_out = jnp.broadcast_to(sig_bhl[..., None], (B, H, L, S))
    return V, series, prior, sigma_out


# --------------------------------------------------------------------------- #
# Pure-JAX reference (mirrors the PyTorch forward; matmuls use the same
# bf16-operand / f32-accumulate MXU path as the kernel) + test
# --------------------------------------------------------------------------- #
def _reference(queries, keys, values, sigma, scale=None, mask_flag=True,
               matmul_dtype=jnp.bfloat16):
    B, L, H, E = queries.shape
    _, S, _, D = values.shape
    scale = scale if scale is not None else 1.0 / math.sqrt(E)
    scores = jnp.einsum('blhe,bshe->bhls',
                        queries.astype(matmul_dtype),
                        keys.astype(matmul_dtype),
                        preferred_element_type=jnp.float32)
    if mask_flag:
        i = jnp.arange(L)[:, None]
        j = jnp.arange(S)[None, :]
        scores = jnp.where(j > i, -jnp.inf, scores)
    attn = scale * scores
    sg = jnp.transpose(sigma, (0, 2, 1))
    sg = jax.nn.sigmoid(sg * 5.0) + 1e-5
    sg = jnp.power(3.0, sg) - 1.0
    sg = jnp.broadcast_to(sg[..., None], attn.shape)
    dist = jnp.abs(jnp.arange(L)[:, None]
                   - jnp.arange(S)[None, :]).astype(jnp.float32)
    prior = (1.0 / (math.sqrt(2.0 * math.pi) * sg)
             * jnp.exp(-dist ** 2 / 2.0 / sg ** 2))
    series = jax.nn.softmax(attn, axis=-1)
    V = jnp.einsum('bhls,bshd->blhd',
                   series.astype(matmul_dtype),
                   values.astype(matmul_dtype),
                   preferred_element_type=jnp.float32)
    return V.astype(queries.dtype), series, prior, sg


if __name__ == "__main__":
    # Small shapes consistent with the module: win_size (=L=S)=8, heads=4,
    # batch=2, head-dim E=D=32.
    B, L, H, E = 2, 8, 4, 32
    S, D = L, E

    key = jax.random.PRNGKey(0)
    kq, kk, kv, ks = jax.random.split(key, 4)
    queries = jax.random.normal(kq, (B, L, H, E), dtype=jnp.float32)
    keys_ = jax.random.normal(kk, (B, S, H, E), dtype=jnp.float32)
    values = jax.random.normal(kv, (B, S, H, D), dtype=jnp.float32)
    sigma = jax.random.normal(ks, (B, L, H), dtype=jnp.float32)

    V, series, prior, sigma_out = anomaly_attention(
        queries, keys_, values, sigma, mask_flag=True)
    jax.block_until_ready((V, series, prior, sigma_out))

    Vr, sr, pr, sgr = _reference(queries, keys_, values, sigma, mask_flag=True)
    assert V.shape == (B, L, H, D) and series.shape == (B, H, L, S)
    assert prior.shape == (B, H, L, S) and sigma_out.shape == (B, H, L, S)
    assert jnp.allclose(series, sr, atol=2e-3, rtol=2e-3)
    assert jnp.allclose(prior, pr, atol=2e-3, rtol=2e-3)
    assert jnp.allclose(V, Vr, atol=1e-2, rtol=1e-2)
    assert jnp.allclose(sigma_out, sgr, atol=1e-5, rtol=1e-5)

    # bf16 fast path (halves the dominant series/prior HBM write traffic).
    Vb, sb, pb, sgb = anomaly_attention(queries, keys_, values, sigma,
                                        mask_flag=True, out_dtype=jnp.bfloat16)
    jax.block_until_ready((Vb, sb, pb, sgb))
    assert jnp.allclose(sb.astype(jnp.float32), sr, atol=3e-2, rtol=3e-2)

    print("KERNEL_OK")
</pallas_src>

<mosaic_0001>
module attributes {stable_mosaic.version = 11 : i64} {
  func.func @_anomaly_attn_kernel(%arg0: i32, %arg1: i32, %arg2: memref<1x8x128xf32, #tpu.memory_space<vmem>>, %arg3: memref<1x8x128xf32, #tpu.memory_space<vmem>>, %arg4: memref<1x8x128xf32, #tpu.memory_space<vmem>>, %arg5: memref<1x8x4xf32, #tpu.memory_space<vmem>>, %arg6: memref<1x8x128xf32, #tpu.memory_space<vmem>>, %arg7: memref<1x4x8x8xf32, #tpu.memory_space<vmem>>, %arg8: memref<1x4x8x8xf32, #tpu.memory_space<vmem>>) attributes {dimension_semantics = [#tpu.dimension_semantics<parallel>, #tpu.dimension_semantics<arbitrary>], iteration_bounds = array<i64: 2, 1>, scalar_prefetch = 0 : i64, scratch_operands = 0 : i64, tpu.core_type = #tpu.core_type<tc>, window_params = [{transform_indices = @transform_0, window_bounds = array<i64: 1, 8, 128>}, {transform_indices = @transform_1, window_bounds = array<i64: 1, 8, 128>}, {transform_indices = @transform_2, window_bounds = array<i64: 1, 8, 128>}, {transform_indices = @transform_3, window_bounds = array<i64: 1, 8, 4>}, {transform_indices = @transform_4, window_bounds = array<i64: 1, 8, 128>}, {transform_indices = @transform_5, window_bounds = array<i64: 1, 4, 8, 8>}, {transform_indices = @transform_6, window_bounds = array<i64: 1, 4, 8, 8>}]} {
    %c8_i32 = arith.constant 8 : i32
    %0 = arith.muli %arg1, %c8_i32 : i32
    %1 = tpu.iota {dimensions = array<i32: 0>} : vector<8x8xi32>
    %2 = vector.broadcast %0 : i32 to vector<8x8xi32>
    %3 = arith.addi %2, %1 : vector<8x8xi32>
    %4 = tpu.iota {dimensions = array<i32: 1>} : vector<8x8xi32>
    %5 = arith.subi %3, %4 : vector<8x8xi32>
    %6 = arith.sitofp %5 : vector<8x8xi32> to vector<8x8xf32>
    %7 = arith.mulf %6, %6 : vector<8x8xf32>
    %8 = arith.cmpi sgt, %4, %3 : vector<8x8xi32>
    %c0 = arith.constant 0 : index
    %c0_0 = arith.constant 0 : index
    %c0_1 = arith.constant 0 : index
    %9 = vector.load %arg2[%c0, %c0_0, %c0_1] : memref<1x8x128xf32, #tpu.memory_space<vmem>>, vector<1x8x32xf32>
    %10 = vector.shape_cast %9 : vector<1x8x32xf32> to vector<8x32xf32>
    %11 = arith.truncf %10 : vector<8x32xf32> to vector<8x32xbf16>
    %c0_2 = arith.constant 0 : index
    %c0_3 = arith.constant 0 : index
    %c0_4 = arith.constant 0 : index
    %12 = vector.load %arg3[%c0_2, %c0_3, %c0_4] : memref<1x8x128xf32, #tpu.memory_space<vmem>>, vector<1x8x32xf32>
    %13 = vector.shape_cast %12 : vector<1x8x32xf32> to vector<8x32xf32>
    %14 = arith.truncf %13 : vector<8x32xf32> to vector<8x32xbf16>
    %c0_5 = arith.constant 0 : index
    %c0_6 = arith.constant 0 : index
    %c0_7 = arith.constant 0 : index
    %15 = vector.load %arg4[%c0_5, %c0_6, %c0_7] : memref<1x8x128xf32, #tpu.memory_space<vmem>>, vector<1x8x32xf32>
    %16 = vector.shape_cast %15 : vector<1x8x32xf32> to vector<8x32xf32>
    %17 = arith.truncf %16 : vector<8x32xf32> to vector<8x32xbf16>
    %cst = arith.constant dense<0.000000e+00> : vector<8x8xf32>
    %18 = tpu.matmul %11, %14, %cst {dimension_numbers = #tpu.dot_dimension_numbers<[1], [1], [0], [0], [0, 0, 1, 0], [], []>} : vector<8x32xbf16>, vector<8x32xbf16>, vector<8x8xf32> -> vector<8x8xf32>
    %cst_8 = arith.constant 0xFF800000 : f32
    %19 = vector.broadcast %cst_8 : f32 to vector<8x8xf32>
    %20 = arith.select %8, %19, %18 : vector<8x8xi1>, vector<8x8xf32>
    %cst_9 = arith.constant 0.176776692 : f32
    %21 = vector.broadcast %cst_9 : f32 to vector<8x8xf32>
    %22 = arith.mulf %20, %21 : vector<8x8xf32>
    %cst_10 = arith.constant dense<0xFF800000> : vector<8xf32>
    %23 = vector.multi_reduction <maximumf>, %22, %cst_10 [1] : vector<8x8xf32> to vector<8xf32>
    %24 = vector.shape_cast %23 : vector<8xf32> to vector<8x1xf32>
    %25 = vector.broadcast %24 : vector<8x1xf32> to vector<8x8xf32>
    %26 = arith.subf %22, %25 : vector<8x8xf32>
    %27 = math.exp %26 : vector<8x8xf32>
    %cst_11 = arith.constant dense<0.000000e+00> : vector<8xf32>
    %28 = vector.multi_reduction <add>, %27, %cst_11 [1] : vector<8x8xf32> to vector<8xf32>
    %29 = vector.shape_cast %28 : vector<8xf32> to vector<8x1xf32>
    %cst_12 = arith.constant 1.000000e+00 : f32
    %30 = vector.broadcast %cst_12 : f32 to vector<8x1xf32>
    %31 = arith.divf %30, %29 : vector<8x1xf32>
    %32 = vector.broadcast %31 : vector<8x1xf32> to vector<8x8xf32>
    %33 = arith.mulf %27, %32 : vector<8x8xf32>
    %34 = arith.truncf %33 : vector<8x8xf32> to vector<8x8xbf16>
    %cst_13 = arith.constant dense<0.000000e+00> : vector<8x32xf32>
    %35 = tpu.matmul %34, %17, %cst_13 {dimension_numbers = #tpu.dot_dimension_numbers<[1], [0], [0], [1], [0, 0, 1, 1], [], []>} : vector<8x8xbf16>, vector<8x32xbf16>, vector<8x32xf32> -> vector<8x32xf32>
    %c0_14 = arith.constant 0 : index
    %c0_15 = arith.constant 0 : index
    %c0_16 = arith.constant 0 : index
    %36 = vector.load %arg5[%c0_14, %c0_15, %c0_16] : memref<1x8x4xf32, #tpu.memory_space<vmem>>, vector<1x8x1xf32>
    %37 = vector.shape_cast %36 : vector<1x8x1xf32> to vector<8x1xf32>
    %cst_17 = arith.constant 1.000000e+00 : f32
    %38 = vector.broadcast %cst_17 : f32 to vector<8x1xf32>
    %39 = arith.divf %38, %37 : vector<8x1xf32>
    %cst_18 = arith.constant 0.398942292 : f32
    %40 = vector.broadcast %cst_18 : f32 to vector<8x1xf32>
    %41 = arith.mulf %40, %39 : vector<8x1xf32>
    %cst_19 = arith.constant -5.000000e-01 : f32
    %42 = vector.broadcast %cst_19 : f32 to vector<8x8xf32>
    %43 = arith.mulf %42, %7 : vector<8x8xf32>
    %44 = arith.mulf %39, %39 : vector<8x1xf32>
    %45 = vector.broadcast %44 : vector<8x1xf32> to vector<8x8xf32>
    %46 = arith.mulf %43, %45 : vector<8x8xf32>
    %47 = math.exp %46 : vector<8x8xf32>
    %48 = vector.broadcast %41 : vector<8x1xf32> to vector<8x8xf32>
    %49 = arith.mulf %48, %47 : vector<8x8xf32>
    %c0_20 = arith.constant 0 : index
    %c0_21 = arith.constant 0 : index
    %c0_22 = arith.constant 0 : index
    %c0_23 = arith.constant 0 : index
    %50 = vector.load %arg7[%c0_20, %c0_21, %c0_22, %c0_23] : memref<1x4x8x8xf32, #tpu.memory_space<vmem>>, vector<1x1x8x8xf32>
    %51 = vector.shape_cast %50 : vector<1x1x8x8xf32> to vector<8x8xf32>
    %52 = vector.shape_cast %33 : vector<8x8xf32> to vector<1x1x8x8xf32>
    tpu.vector_store %arg7[%c0_20, %c0_21, %c0_22, %c0_23], %52 {strides = array<i32>} : memref<1x4x8x8xf32, #tpu.memory_space<vmem>>, vector<1x1x8x8xf32>,
    %c0_24 = arith.constant 0 : index
    %c0_25 = arith.constant 0 : index
    %c0_26 = arith.constant 0 : index
    %c0_27 = arith.constant 0 : index
    %53 = vector.load %arg8[%c0_24, %c0_25, %c0_26, %c0_27] : memref<1x4x8x8xf32, #tpu.memory_space<vmem>>, vector<1x1x8x8xf32>
    %54 = vector.shape_cast %53 : vector<1x1x8x8xf32> to vector<8x8xf32>
    %55 = vector.shape_cast %49 : vector<8x8xf32> to vector<1x1x8x8xf32>
    tpu.vector_store %arg8[%c0_24, %c0_25, %c0_26, %c0_27], %55 {strides = array<i32>} : memref<1x4x8x8xf32, #tpu.memory_space<vmem>>, vector<1x1x8x8xf32>,
    %c0_28 = arith.constant 0 : index
    %c0_29 = arith.constant 0 : index
    %c32 = arith.constant 32 : index
    %56 = vector.load %arg2[%c0_28, %c0_29, %c32] : memref<1x8x128xf32, #tpu.memory_space<vmem>>, vector<1x8x32xf32>
    %57 = vector.shape_cast %56 : vector<1x8x32xf32> to vector<8x32xf32>
    %58 = arith.truncf %57 : vector<8x32xf32> to vector<8x32xbf16>
    %c0_30 = arith.constant 0 : index
    %c0_31 = arith.constant 0 : index
    %c32_32 = arith.constant 32 : index
    %59 = vector.load %arg3[%c0_30, %c0_31, %c32_32] : memref<1x8x128xf32, #tpu.memory_space<vmem>>, vector<1x8x32xf32>
    %60 = vector.shape_cast %59 : vector<1x8x32xf32> to vector<8x32xf32>
    %61 = arith.truncf %60 : vector<8x32xf32> to vector<8x32xbf16>
    %c0_33 = arith.constant 0 : index
    %c0_34 = arith.constant 0 : index
    %c32_35 = arith.constant 32 : index
    %62 = vector.load %arg4[%c0_33, %c0_34, %c32_35] : memref<1x8x128xf32, #tpu.memory_space<vmem>>, vector<1x8x32xf32>
    %63 = vector.shape_cast %62 : vector<1x8x32xf32> to vector<8x32xf32>
    %64 = arith.truncf %63 : vector<8x32xf32> to vector<8x32xbf16>
    %cst_36 = arith.constant dense<0.000000e+00> : vector<8x8xf32>
    %65 = tpu.matmul %58, %61, %cst_36 {dimension_numbers = #tpu.dot_dimension_numbers<[1], [1], [0], [0], [0, 0, 1, 0], [], []>} : vector<8x32xbf16>, vector<8x32xbf16>, vector<8x8xf32> -> vector<8x8xf32>
    %cst_37 = arith.constant 0xFF800000 : f32
    %66 = vector.broadcast %cst_37 : f32 to vector<8x8xf32>
    %67 = arith.select %8, %66, %65 : vector<8x8xi1>, vector<8x8xf32>
    %cst_38 = arith.constant 0.176776692 : f32
    %68 = vector.broadcast %cst_38 : f32 to vector<8x8xf32>
    %69 = arith.mulf %67, %68 : vector<8x8xf32>
    %cst_39 = arith.constant dense<0xFF800000> : vector<8xf32>
    %70 = vector.multi_reduction <maximumf>, %69, %cst_39 [1] : vector<8x8xf32> to vector<8xf32>
    %71 = vector.shape_cast %70 : vector<8xf32> to vector<8x1xf32>
    %72 = vector.broadcast %71 : vector<8x1xf32> to vector<8x8xf32>
    %73 = arith.subf %69, %72 : vector<8x8xf32>
    %74 = math.exp %73 : vector<8x8xf32>
    %cst_40 = arith.constant dense<0.000000e+00> : vector<8xf32>
    %75 = vector.multi_reduction <add>, %74, %cst_40 [1] : vector<8x8xf32> to vector<8xf32>
    %76 = vector.shape_cast %75 : vector<8xf32> to vector<8x1xf32>
    %cst_41 = arith.constant 1.000000e+00 : f32
    %77 = vector.broadcast %cst_41 : f32 to vector<8x1xf32>
    %78 = arith.divf %77, %76 : vector<8x1xf32>
    %79 = vector.broadcast %78 : vector<8x1xf32> to vector<8x8xf32>
    %80 = arith.mulf %74, %79 : vector<8x8xf32>
    %81 = arith.truncf %80 : vector<8x8xf32> to vector<8x8xbf16>
    %cst_42 = arith.constant dense<0.000000e+00> : vector<8x32xf32>
    %82 = tpu.matmul %81, %64, %cst_42 {dimension_numbers = #tpu.dot_dimension_numbers<[1], [0], [0], [1], [0, 0, 1, 1], [], []>} : vector<8x8xbf16>, vector<8x32xbf16>, vector<8x32xf32> -> vector<8x32xf32>
    %c0_43 = arith.constant 0 : index
    %c0_44 = arith.constant 0 : index
    %c1 = arith.constant 1 : index
    %83 = vector.load %arg5[%c0_43, %c0_44, %c1] : memref<1x8x4xf32, #tpu.memory_space<vmem>>, vector<1x8x1xf32>
    %84 = vector.shape_cast %83 : vector<1x8x1xf32> to vector<8x1xf32>
    %cst_45 = arith.constant 1.000000e+00 : f32
    %85 = vector.broadcast %cst_45 : f32 to vector<8x1xf32>
    %86 = arith.divf %85, %84 : vector<8x1xf32>
    %cst_46 = arith.constant 0.398942292 : f32
    %87 = vector.broadcast %cst_46 : f32 to vector<8x1xf32>
    %88 = arith.mulf %87, %86 : vector<8x1xf32>
    %cst_47 = arith.constant -5.000000e-01 : f32
    %89 = vector.broadcast %cst_47 : f32 to vector<8x8xf32>
    %90 = arith.mulf %89, %7 : vector<8x8xf32>
    %91 = arith.mulf %86, %86 : vector<8x1xf32>
    %92 = vector.broadcast %91 : vector<8x1xf32> to vector<8x8xf32>
    %93 = arith.mulf %90, %92 : vector<8x8xf32>
    %94 = math.exp %93 : vector<8x8xf32>
    %95 = vector.broadcast %88 : vector<8x1xf32> to vector<8x8xf32>
    %96 = arith.mulf %95, %94 : vector<8x8xf32>
    %c0_48 = arith.constant 0 : index
    %c1_49 = arith.constant 1 : index
    %c0_50 = arith.constant 0 : index
    %c0_51 = arith.constant 0 : index
    %97 = vector.load %arg7[%c0_48, %c1_49, %c0_50, %c0_51] : memref<1x4x8x8xf32, #tpu.memory_space<vmem>>, vector<1x1x8x8xf32>
    %98 = vector.shape_cast %97 : vector<1x1x8x8xf32> to vector<8x8xf32>
    %99 = vector.shape_cast %80 : vector<8x8xf32> to vector<1x1x8x8xf32>
    tpu.vector_store %arg7[%c0_48, %c1_49, %c0_50, %c0_51], %99 {strides = array<i32>} : memref<1x4x8x8xf32, #tpu.memory_space<vmem>>, vector<1x1x8x8xf32>,
    %c0_52 = arith.constant 0 : index
    %c1_53 = arith.constant 1 : index
    %c0_54 = arith.constant 0 : index
    %c0_55 = arith.constant 0 : index
    %100 = vector.load %arg8[%c0_52, %c1_53, %c0_54, %c0_55] : memref<1x4x8x8xf32, #tpu.memory_space<vmem>>, vector<1x1x8x8xf32>
    %101 = vector.shape_cast %100 : vector<1x1x8x8xf32> to vector<8x8xf32>
    %102 = vector.shape_cast %96 : vector<8x8xf32> to vector<1x1x8x8xf32>
    tpu.vector_store %arg8[%c0_52, %c1_53, %c0_54, %c0_55], %102 {strides = array<i32>} : memref<1x4x8x8xf32, #tpu.memory_space<vmem>>, vector<1x1x8x8xf32>,
    %c0_56 = arith.constant 0 : index
    %c0_57 = arith.constant 0 : index
    %c64 = arith.constant 64 : index
    %103 = vector.load %arg2[%c0_56, %c0_57, %c64] : memref<1x8x128xf32, #tpu.memory_space<vmem>>, vector<1x8x32xf32>
    %104 = vector.shape_cast %103 : vector<1x8x32xf32> to vector<8x32xf32>
    %105 = arith.truncf %104 : vector<8x32xf32> to vector<8x32xbf16>
    %c0_58 = arith.constant 0 : index
    %c0_59 = arith.constant 0 : index
    %c64_60 = arith.constant 64 : index
    %106 = vector.load %arg3[%c0_58, %c0_59, %c64_60] : memref<1x8x128xf32, #tpu.memory_space<vmem>>, vector<1x8x32xf32>
    %107 = vector.shape_cast %106 : vector<1x8x32xf32> to vector<8x32xf32>
    %108 = arith.truncf %107 : vector<8x32xf32> to vector<8x32xbf16>
    %c0_61 = arith.constant 0 : index
    %c0_62 = arith.constant 0 : index
    %c64_63 = arith.constant 64 : index
    %109 = vector.load %arg4[%c0_61, %c0_62, %c64_63] : memref<1x8x128xf32, #tpu.memory_space<vmem>>, vector<1x8x32xf32>
    %110 = vector.shape_cast %109 : vector<1x8x32xf32> to vector<8x32xf32>
    %111 = arith.truncf %110 : vector<8x32xf32> to vector<8x32xbf16>
    %cst_64 = arith.constant dense<0.000000e+00> : vector<8x8xf32>
    %112 = tpu.matmul %105, %108, %cst_64 {dimension_numbers = #tpu.dot_dimension_numbers<[1], [1], [0], [0], [0, 0, 1, 0], [], []>} : vector<8x32xbf16>, vector<8x32xbf16>, vector<8x8xf32> -> vector<8x8xf32>
    %cst_65 = arith.constant 0xFF800000 : f32
    %113 = vector.broadcast %cst_65 : f32 to vector<8x8xf32>
    %114 = arith.select %8, %113, %112 : vector<8x8xi1>, vector<8x8xf32>
    %cst_66 = arith.constant 0.176776692 : f32
    %115 = vector.broadcast %cst_66 : f32 to vector<8x8xf32>
    %116 = arith.mulf %114, %115 : vector<8x8xf32>
    %cst_67 = arith.constant dense<0xFF800000> : vector<8xf32>
    %117 = vector.multi_reduction <maximumf>, %116, %cst_67 [1] : vector<8x8xf32> to vector<8xf32>
    %118 = vector.shape_cast %117 : vector<8xf32> to vector<8x1xf32>
    %119 = vector.broadcast %118 : vector<8x1xf32> to vector<8x8xf32>
    %120 = arith.subf %116, %119 : vector<8x8xf32>
    %121 = math.exp %120 : vector<8x8xf32>
    %cst_68 = arith.constant dense<0.000000e+00> : vector<8xf32>
    %122 = vector.multi_reduction <add>, %121, %cst_68 [1] : vector<8x8xf32> to vector<8xf32>
    %123 = vector.shape_cast %122 : vector<8xf32> to vector<8x1xf32>
    %cst_69 = arith.constant 1.000000e+00 : f32
    %124 = vector.broadcast %cst_69 : f32 to vector<8x1xf32>
    %125 = arith.divf %124, %123 : vector<8x1xf32>
    %126 = vector.broadcast %125 : vector<8x1xf32> to vector<8x8xf32>
    %127 = arith.mulf %121, %126 : vector<8x8xf32>
    %128 = arith.truncf %127 : vector<8x8xf32> to vector<8x8xbf16>
    %cst_70 = arith.constant dense<0.000000e+00> : vector<8x32xf32>
    %129 = tpu.matmul %128, %111, %cst_70 {dimension_numbers = #tpu.dot_dimension_numbers<[1], [0], [0], [1], [0, 0, 1, 1], [], []>} : vector<8x8xbf16>, vector<8x32xbf16>, vector<8x32xf32> -> vector<8x32xf32>
    %c0_71 = arith.constant 0 : index
    %c0_72 = arith.constant 0 : index
    %c2 = arith.constant 2 : index
    %130 = vector.load %arg5[%c0_71, %c0_72, %c2] : memref<1x8x4xf32, #tpu.memory_space<vmem>>, vector<1x8x1xf32>
    %131 = vector.shape_cast %130 : vector<1x8x1xf32> to vector<8x1xf32>
    %cst_73 = arith.constant 1.000000e+00 : f32
    %132 = vector.broadcast %cst_73 : f32 to vector<8x1xf32>
    %133 = arith.divf %132, %131 : vector<8x1xf32>
    %cst_74 = arith.constant 0.398942292 : f32
    %134 = vector.broadcast %cst_74 : f32 to vector<8x1xf32>
    %135 = arith.mulf %134, %133 : vector<8x1xf32>
    %cst_75 = arith.constant -5.000000e-01 : f32
    %136 = vector.broadcast %cst_75 : f32 to vector<8x8xf32>
    %137 = arith.mulf %136, %7 : vector<8x8xf32>
    %138 = arith.mulf %133, %133 : vector<8x1xf32>
    %139 = vector.broadcast %138 : vector<8x1xf32> to vector<8x8xf32>
    %140 = arith.mulf %137, %139 : vector<8x8xf32>
    %141 = math.exp %140 : vector<8x8xf32>
    %142 = vector.broadcast %135 : vector<8x1xf32> to vector<8x8xf32>
    %143 = arith.mulf %142, %141 : vector<8x8xf32>
    %c0_76 = arith.constant 0 : index
    %c2_77 = arith.constant 2 : index
    %c0_78 = arith.constant 0 : index
    %c0_79 = arith.constant 0 : index
    %144 = vector.load %arg7[%c0_76, %c2_77, %c0_78, %c0_79] : memref<1x4x8x8xf32, #tpu.memory_space<vmem>>, vector<1x1x8x8xf32>
    %145 = vector.shape_cast %144 : vector<1x1x8x8xf32> to vector<8x8xf32>
    %146 = vector.shape_cast %127 : vector<8x8xf32> to vector<1x1x8x8xf32>
    tpu.vector_store %arg7[%c0_76, %c2_77, %c0_78, %c0_79], %146 {strides = array<i32>} : memref<1x4x8x8xf32, #tpu.memory_space<vmem>>, vector<1x1x8x8xf32>,
    %c0_80 = arith.constant 0 : index
    %c2_81 = arith.constant 2 : index
    %c0_82 = arith.constant 0 : index
    %c0_83 = arith.constant 0 : index
    %147 = vector.load %arg8[%c0_80, %c2_81, %c0_82, %c0_83] : memref<1x4x8x8xf32, #tpu.memory_space<vmem>>, vector<1x1x8x8xf32>
    %148 = vector.shape_cast %147 : vector<1x1x8x8xf32> to vector<8x8xf32>
    %149 = vector.shape_cast %143 : vector<8x8xf32> to vector<1x1x8x8xf32>
    tpu.vector_store %arg8[%c0_80, %c2_81, %c0_82, %c0_83], %149 {strides = array<i32>} : memref<1x4x8x8xf32, #tpu.memory_space<vmem>>, vector<1x1x8x8xf32>,
    %c0_84 = arith.constant 0 : index
    %c0_85 = arith.constant 0 : index
    %c96 = arith.constant 96 : index
    %150 = vector.load %arg2[%c0_84, %c0_85, %c96] : memref<1x8x128xf32, #tpu.memory_space<vmem>>, vector<1x8x32xf32>
    %151 = vector.shape_cast %150 : vector<1x8x32xf32> to vector<8x32xf32>
    %152 = arith.truncf %151 : vector<8x32xf32> to vector<8x32xbf16>
    %c0_86 = arith.constant 0 : index
    %c0_87 = arith.constant 0 : index
    %c96_88 = arith.constant 96 : index
    %153 = vector.load %arg3[%c0_86, %c0_87, %c96_88] : memref<1x8x128xf32, #tpu.memory_space<vmem>>, vector<1x8x32xf32>
    %154 = vector.shape_cast %153 : vector<1x8x32xf32> to vector<8x32xf32>
    %155 = arith.truncf %154 : vector<8x32xf32> to vector<8x32xbf16>
    %c0_89 = arith.constant 0 : index
    %c0_90 = arith.constant 0 : index
    %c96_91 = arith.constant 96 : index
    %156 = vector.load %arg4[%c0_89, %c0_90, %c96_91] : memref<1x8x128xf32, #tpu.memory_space<vmem>>, vector<1x8x32xf32>
    %157 = vector.shape_cast %156 : vector<1x8x32xf32> to vector<8x32xf32>
    %158 = arith.truncf %157 : vector<8x32xf32> to vector<8x32xbf16>
    %cst_92 = arith.constant dense<0.000000e+00> : vector<8x8xf32>
    %159 = tpu.matmul %152, %155, %cst_92 {dimension_numbers = #tpu.dot_dimension_numbers<[1], [1], [0], [0], [0, 0, 1, 0], [], []>} : vector<8x32xbf16>, vector<8x32xbf16>, vector<8x8xf32> -> vector<8x8xf32>
    %cst_93 = arith.constant 0xFF800000 : f32
    %160 = vector.broadcast %cst_93 : f32 to vector<8x8xf32>
    %161 = arith.select %8, %160, %159 : vector<8x8xi1>, vector<8x8xf32>
    %cst_94 = arith.constant 0.176776692 : f32
    %162 = vector.broadcast %cst_94 : f32 to vector<8x8xf32>
    %163 = arith.mulf %161, %162 : vector<8x8xf32>
    %cst_95 = arith.constant dense<0xFF800000> : vector<8xf32>
    %164 = vector.multi_reduction <maximumf>, %163, %cst_95 [1] : vector<8x8xf32> to vector<8xf32>
    %165 = vector.shape_cast %164 : vector<8xf32> to vector<8x1xf32>
    %166 = vector.broadcast %165 : vector<8x1xf32> to vector<8x8xf32>
    %167 = arith.subf %163, %166 : vector<8x8xf32>
    %168 = math.exp %167 : vector<8x8xf32>
    %cst_96 = arith.constant dense<0.000000e+00> : vector<8xf32>
    %169 = vector.multi_reduction <add>, %168, %cst_96 [1] : vector<8x8xf32> to vector<8xf32>
    %170 = vector.shape_cast %169 : vector<8xf32> to vector<8x1xf32>
    %cst_97 = arith.constant 1.000000e+00 : f32
    %171 = vector.broadcast %cst_97 : f32 to vector<8x1xf32>
    %172 = arith.divf %171, %170 : vector<8x1xf32>
    %173 = vector.broadcast %172 : vector<8x1xf32> to vector<8x8xf32>
    %174 = arith.mulf %168, %173 : vector<8x8xf32>
    %175 = arith.truncf %174 : vector<8x8xf32> to vector<8x8xbf16>
    %cst_98 = arith.constant dense<0.000000e+00> : vector<8x32xf32>
    %176 = tpu.matmul %175, %158, %cst_98 {dimension_numbers = #tpu.dot_dimension_numbers<[1], [0], [0], [1], [0, 0, 1, 1], [], []>} : vector<8x8xbf16>, vector<8x32xbf16>, vector<8x32xf32> -> vector<8x32xf32>
    %177 = tpu.concatenate %35, %82, %129, %176 in 1 : vector<8x32xf32>, vector<8x32xf32>, vector<8x32xf32>, vector<8x32xf32> -> vector<8x128xf32>
    %c0_99 = arith.constant 0 : index
    %c0_100 = arith.constant 0 : index
    %c0_101 = arith.constant 0 : index
    %178 = vector.load %arg6[%c0_99, %c0_100, %c0_101] : memref<1x8x128xf32, #tpu.memory_space<vmem>>, vector<1x8x128xf32>
    %179 = vector.shape_cast %178 : vector<1x8x128xf32> to vector<8x128xf32>
    %180 = vector.shape_cast %177 : vector<8x128xf32> to vector<1x8x128xf32>
    tpu.vector_store %arg6[%c0_99, %c0_100, %c0_101], %180 {strides = array<i32>} : memref<1x8x128xf32, #tpu.memory_space<vmem>>, vector<1x8x128xf32>,
    %c0_102 = arith.constant 0 : index
    %c0_103 = arith.constant 0 : index
    %c3 = arith.constant 3 : index
    %181 = vector.load %arg5[%c0_102, %c0_103, %c3] : memref<1x8x4xf32, #tpu.memory_space<vmem>>, vector<1x8x1xf32>
    %182 = vector.shape_cast %181 : vector<1x8x1xf32> to vector<8x1xf32>
    %cst_104 = arith.constant 1.000000e+00 : f32
    %183 = vector.broadcast %cst_104 : f32 to vector<8x1xf32>
    %184 = arith.divf %183, %182 : vector<8x1xf32>
    %cst_105 = arith.constant 0.398942292 : f32
    %185 = vector.broadcast %cst_105 : f32 to vector<8x1xf32>
    %186 = arith.mulf %185, %184 : vector<8x1xf32>
    %cst_106 = arith.constant -5.000000e-01 : f32
    %187 = vector.broadcast %cst_106 : f32 to vector<8x8xf32>
    %188 = arith.mulf %187, %7 : vector<8x8xf32>
    %189 = arith.mulf %184, %184 : vector<8x1xf32>
    %190 = vector.broadcast %189 : vector<8x1xf32> to vector<8x8xf32>
    %191 = arith.mulf %188, %190 : vector<8x8xf32>
    %192 = math.exp %191 : vector<8x8xf32>
    %193 = vector.broadcast %186 : vector<8x1xf32> to vector<8x8xf32>
    %194 = arith.mulf %193, %192 : vector<8x8xf32>
    %c0_107 = arith.constant 0 : index
    %c3_108 = arith.constant 3 : index
    %c0_109 = arith.constant 0 : index
    %c0_110 = arith.constant 0 : index
    %195 = vector.load %arg7[%c0_107, %c3_108, %c0_109, %c0_110] : memref<1x4x8x8xf32, #tpu.memory_space<vmem>>, vector<1x1x8x8xf32>
    %196 = vector.shape_cast %195 : vector<1x1x8x8xf32> to vector<8x8xf32>
    %197 = vector.shape_cast %174 : vector<8x8xf32> to vector<1x1x8x8xf32>
    tpu.vector_store %arg7[%c0_107, %c3_108, %c0_109, %c0_110], %197 {strides = array<i32>} : memref<1x4x8x8xf32, #tpu.memory_space<vmem>>, vector<1x1x8x8xf32>,
    %c0_111 = arith.constant 0 : index
    %c3_112 = arith.constant 3 : index
    %c0_113 = arith.constant 0 : index
    %c0_114 = arith.constant 0 : index
    %198 = vector.load %arg8[%c0_111, %c3_112, %c0_113, %c0_114] : memref<1x4x8x8xf32, #tpu.memory_space<vmem>>, vector<1x1x8x8xf32>
    %199 = vector.shape_cast %198 : vector<1x1x8x8xf32> to vector<8x8xf32>
    %200 = vector.shape_cast %194 : vector<8x8xf32> to vector<1x1x8x8xf32>
    tpu.vector_store %arg8[%c0_111, %c3_112, %c0_113, %c0_114], %200 {strides = array<i32>} : memref<1x4x8x8xf32, #tpu.memory_space<vmem>>, vector<1x1x8x8xf32>,
    return
  }
  func.func @transform_0(%arg0: i32, %arg1: i32) -> (i32, i32, i32) {
    %c0_i32 = arith.constant 0 : i32
    %c0_i32_0 = arith.constant 0 : i32
    return %arg0, %arg1, %c0_i32 : i32, i32, i32
  }
  func.func @transform_1(%arg0: i32, %arg1: i32) -> (i32, i32, i32) {
    %c0_i32 = arith.constant 0 : i32
    %c0_i32_0 = arith.constant 0 : i32
    %c0_i32_1 = arith.constant 0 : i32
    return %arg0, %c0_i32, %c0_i32_0 : i32, i32, i32
  }
  func.func @transform_2(%arg0: i32, %arg1: i32) -> (i32, i32, i32) {
    %c0_i32 = arith.constant 0 : i32
    %c0_i32_0 = arith.constant 0 : i32
    %c0_i32_1 = arith.constant 0 : i32
    return %arg0, %c0_i32, %c0_i32_0 : i32, i32, i32
  }
  func.func @transform_3(%arg0: i32, %arg1: i32) -> (i32, i32, i32) {
    %c0_i32 = arith.constant 0 : i32
    %c0_i32_0 = arith.constant 0 : i32
    return %arg0, %arg1, %c0_i32 : i32, i32, i32
  }
  func.func @transform_4(%arg0: i32, %arg1: i32) -> (i32, i32, i32) {
    %c0_i32 = arith.constant 0 : i32
    %c0_i32_0 = arith.constant 0 : i32
    return %arg0, %arg1, %c0_i32 : i32, i32, i32
  }
  func.func @transform_5(%arg0: i32, %arg1: i32) -> (i32, i32, i32, i32) {
    %c0_i32 = arith.constant 0 : i32
    %c0_i32_0 = arith.constant 0 : i32
    %c0_i32_1 = arith.constant 0 : i32
    return %arg0, %c0_i32, %arg1, %c0_i32_0 : i32, i32, i32, i32
  }
  func.func @transform_6(%arg0: i32, %arg1: i32) -> (i32, i32, i32, i32) {
    %c0_i32 = arith.constant 0 : i32
    %c0_i32_0 = arith.constant 0 : i32
    %c0_i32_1 = arith.constant 0 : i32
    return %arg0, %c0_i32, %arg1, %c0_i32_0 : i32, i32, i32, i32
  }
}

</mosaic_0001>

<llo_original>
// kernel: tpu_custom_call.1
$region0: #{tpu_custom_call.1}
  #allocation0 [shape = 'u32[]', space=smem, size = 0x4, offset = 0x4, fixed_abs, tag = 'smem constant byte address 0x4 - core index']
  #allocation1 [shape = 'u32[72,128]{1,0:T(1,128)}', space=vmem, size = 0x9000, scoped, tag = 'internal scratch']
  %s0 = inlined_call_operand.vmem [shape: f32[2,8,128], index: 0, kind: input, shape index: {}]
  %s1 = inlined_call_operand.hbm [shape: f32[2,8,128], index: 1, kind: input, shape index: {}]
  %s2 = inlined_call_operand.hbm [shape: f32[2,8,128], index: 2, kind: input, shape index: {}]
  %s3 = inlined_call_operand.vmem [shape: f32[2,8,4], index: 3, kind: input, shape index: {}]
  %s4 = inlined_call_operand.hbm [shape: f32[2,8,128], index: 4, kind: output, shape index: {0}]
  %s5 = inlined_call_operand.hbm [shape: f32[2,4,8,8], index: 5, kind: output, shape index: {1}]
  %s6 = inlined_call_operand.hbm [shape: f32[2,4,8,8], index: 6, kind: output, shape index: {2}]
  %7 = xla_tuple %s4, %s5, %s6
  %s8 = sld [smem:[#allocation0]]
  $region73: #{tpu_custom_call.1} parent=0
    _
  %s10 = ssub.s32 1, %s8
  %s11 = scalar_select 0, %s10, %s8
  $region1: #{tpu_custom_call.1} parent=0
    #allocation2 [shape = 'u8[8192]{0}', space=vmem, size = 0x2000, scoped, tag = 'input window, operand 1']
    #allocation3 [shape = 's32[2]{0}', space=sflag, size = 0x8, scoped, tag = 'scoped memory for tpu_custom_call.1']
    #allocation4 [shape = 's32[2]{0}', space=sflag, size = 0x8, scoped, tag = 'scoped memory for tpu_custom_call.1']
    #allocation5 [shape = 'u8[8192]{0}', space=vmem, size = 0x2000, scoped, tag = 'input window, operand 2']
    #allocation6 [shape = 's32[2]{0}', space=sflag, size = 0x8, scoped, tag = 'scoped memory for tpu_custom_call.1']
    #allocation7 [shape = 'u8[8192]{0}', space=vmem, size = 0x2000, scoped, tag = 'output window, operand 0']
    #allocation8 [shape = 'u8[32768]{0}', space=vmem, size = 0x8000, scoped, tag = 'output window, operand 1']
    #allocation9 [shape = 's32[2]{0}', space=sflag, size = 0x8, scoped, tag = 'scoped memory for tpu_custom_call.1']
    #allocation10 [shape = 'u8[32768]{0}', space=vmem, size = 0x8000, scoped, tag = 'output window, operand 2']
    %12 = vsyncpa [#allocation3], 0
    %s13 = scalar_lea.sflag [#allocation3], 1
    %14 = vsyncpa %s13, 0
    %15 = vsyncpa [#allocation6], 0
    %s16 = scalar_lea.sflag [#allocation6], 1
    %17 = vsyncpa %s16, 0
    %18 = vsyncpa [#allocation4], 0
    %s19 = scalar_lea.sflag [#allocation4], 1
    %20 = vsyncpa %s19, 0
    %21 = vsyncpa [#allocation9], 0
    %s22 = scalar_lea.sflag [#allocation9], 1
    %23 = vsyncpa %s22, 0
    loop: start=0, step=1, limit=4
    $region2: #{tpu_custom_call.1} parent=1 // loop_pre_header
      _
    $region3: #{tpu_custom_call.1} parent=1 // loop_header
      %s25 = sphi 0, %s29
      %p26 = scmp.ge.s32.totalorder %s25, 4
      %s32 = sphi 0, %s44
      %s33 = sphi 0, %s40
      %s34 = sphi 0, %s32
      %s35 = sphi 0, %s33
      %s36 = sphi 0, %s34
      %s37 = sphi 0, %s35
      %s49 = sphi 0, %s51
      %s52 = sphi 0, %s49
      %s53 = sphi 0, %s52
      %s69 = sphi 0, %s53
      %s75 = sphi 0, %s77
      %s78 = sphi 0, %s75
      %s79 = sphi 0, %s78
      %s95 = sphi 0, %s79
      %s101 = sphi 0, %s103
      %s104 = sphi 0, %s101
      %s105 = sphi 0, %s104
      %s121 = sphi 0, %s105
      %s129 = sphi 0, %s131
      %s132 = sphi 0, %s129
      %s133 = sphi 0, %s132
      %s149 = sphi 0, %s133
      %s157 = sphi 0, %s159
      %s160 = sphi 0, %s157
      %s161 = sphi 0, %s160
      %s177 = sphi 0, %s161
      %s185 = sphi 0, %s187
      %s188 = sphi 0, %s185
      %s189 = sphi 0, %s188
      %s205 = sphi 0, %s189
      %s213 = sphi 0, %s215
      %s216 = sphi 0, %s213
      %s217 = sphi 0, %s216
      %s233 = sphi 0, %s217
    $region4: #{tpu_custom_call.1} parent=1 // loop_header_branch
      %28 = sbr.rel (%p26) target = $region8
    $region5: #{tpu_custom_call.1} parent=1 // loop_body
      %s30 = ssub.s32 %s25, 1
      %s31 = ssub.s32 %s25, 2
      %s38 = sadd.s32 1, %s33
      %p39 = scmp.ge.s32.totalorder %s38, 1
      %s40 = scalar_select %p39, 0, %s38
      %s41 = sadd.s32 1, %s32
      %s42 = scalar_select %p39, %s41, %s32
      %p43 = scmp.ge.s32.totalorder %s42, 2
      %s44 = scalar_select %p43, 0, %s42
      %s45 = ssub.s32 %s32, %s44
      %s46 = ssub.s32 %s33, %s40
      %s47 = sor.u32 %s45, %s46
      %p48 = scmp.eq.s32.totalorder %s47, 0
      %s50 = sadd.s32 %s49, 1
      %s51 = scalar_select %p48, %s49, %s50
      %p54 = pneg %p48
      %p55 = scmp.eq.s32.totalorder %s25, 1
      %p56 = por %p54, %p55
      %p57 = scmp.ne.s32.totalorder %s49, %s52
      %p58 = scmp.eq.s32.totalorder %s25, 0
      %p59 = por %p57, %p58
      %p60 = scmp.ne.s32.totalorder %s49, %s52
      %p61 = scmp.eq.s32.totalorder %s30, 1
      %p62 = por %p60, %p61
      %p63 = scmp.ne.s32.totalorder %s52, %s53
      %p64 = scmp.eq.s32.totalorder %s30, 0
      %p65 = por %p63, %p64
      %p66 = scmp.ne.s32.totalorder %s52, %s53
      %p67 = scmp.eq.s32.totalorder %s31, 1
      %p68 = por %p66, %p67
      %p70 = scmp.ne.s32.totalorder %s53, %s69
      %p71 = scmp.eq.s32.totalorder %s31, 0
      %p72 = por %p70, %p71
      %s73 = ssub.s32 %s32, %s44
      %p74 = scmp.eq.s32.totalorder %s73, 0
      %s76 = sadd.s32 %s75, 1
      %s77 = scalar_select %p74, %s75, %s76
      %p80 = pneg %p74
      %p81 = scmp.eq.s32.totalorder %s25, 1
      %p82 = por %p80, %p81
      %p83 = scmp.ne.s32.totalorder %s75, %s78
      %p84 = scmp.eq.s32.totalorder %s25, 0
      %p85 = por %p83, %p84
      %p86 = scmp.ne.s32.totalorder %s75, %s78
      %p87 = scmp.eq.s32.totalorder %s30, 1
      %p88 = por %p86, %p87
      %p89 = scmp.ne.s32.totalorder %s78, %s79
      %p90 = scmp.eq.s32.totalorder %s30, 0
      %p91 = por %p89, %p90
      %p92 = scmp.ne.s32.totalorder %s78, %s79
      %p93 = scmp.eq.s32.totalorder %s31, 1
      %p94 = por %p92, %p93
      %p96 = scmp.ne.s32.totalorder %s79, %s95
      %p97 = scmp.eq.s32.totalorder %s31, 0
      %p98 = por %p96, %p97
      %s99 = ssub.s32 %s32, %s44
      %p100 = scmp.eq.s32.totalorder %s99, 0
      %s102 = sadd.s32 %s101, 1
      %s103 = scalar_select %p100, %s101, %s102
      %p106 = pneg %p100
      %p107 = scmp.eq.s32.totalorder %s25, 1
      %p108 = por %p106, %p107
      %p109 = scmp.ne.s32.totalorder %s101, %s104
      %p110 = scmp.eq.s32.totalorder %s25, 0
      %p111 = por %p109, %p110
      %p112 = scmp.ne.s32.totalorder %s101, %s104
      %p113 = scmp.eq.s32.totalorder %s30, 1
      %p114 = por %p112, %p113
      %p115 = scmp.ne.s32.totalorder %s104, %s105
      %p116 = scmp.eq.s32.totalorder %s30, 0
      %p117 = por %p115, %p116
      %p118 = scmp.ne.s32.totalorder %s104, %s105
      %p119 = scmp.eq.s32.totalorder %s31, 1
      %p120 = por %p118, %p119
      %p122 = scmp.ne.s32.totalorder %s105, %s121
      %p123 = scmp.eq.s32.totalorder %s31, 0
      %p124 = por %p122, %p123
      %s125 = ssub.s32 %s32, %s44
      %s126 = ssub.s32 %s33, %s40
      %s127 = sor.u32 %s125, %s126
      %p128 = scmp.eq.s32.totalorder %s127, 0
      %s130 = sadd.s32 %s129, 1
      %s131 = scalar_select %p128, %s129, %s130
      %p134 = pneg %p128
      %p135 = scmp.eq.s32.totalorder %s25, 1
      %p136 = por %p134, %p135
      %p137 = scmp.ne.s32.totalorder %s129, %s132
      %p138 = scmp.eq.s32.totalorder %s25, 0
      %p139 = por %p137, %p138
      %p140 = scmp.ne.s32.totalorder %s129, %s132
      %p141 = scmp.eq.s32.totalorder %s30, 1
      %p142 = por %p140, %p141
      %p143 = scmp.ne.s32.totalorder %s132, %s133
      %p144 = scmp.eq.s32.totalorder %s30, 0
      %p145 = por %p143, %p144
      %p146 = scmp.ne.s32.totalorder %s132, %s133
      %p147 = scmp.eq.s32.totalorder %s31, 1
      %p148 = por %p146, %p147
      %p150 = scmp.ne.s32.totalorder %s133, %s149
      %p151 = scmp.eq.s32.totalorder %s31, 0
      %p152 = por %p150, %p151
      %s153 = ssub.s32 %s32, %s44
      %s154 = ssub.s32 %s33, %s40
      %s155 = sor.u32 %s153, %s154
      %p156 = scmp.eq.s32.totalorder %s155, 0
      %s158 = sadd.s32 %s157, 1
      %s159 = scalar_select %p156, %s157, %s158
      %p162 = pneg %p156
      %p163 = scmp.eq.s32.totalorder %s25, 1
      %p164 = por %p162, %p163
      %p165 = scmp.ne.s32.totalorder %s157, %s160
      %p166 = scmp.eq.s32.totalorder %s25, 0
      %p167 = por %p165, %p166
      %p168 = scmp.ne.s32.totalorder %s157, %s160
      %p169 = scmp.eq.s32.totalorder %s30, 1
      %p170 = por %p168, %p169
      %p171 = scmp.ne.s32.totalorder %s160, %s161
      %p172 = scmp.eq.s32.totalorder %s30, 0
      %p173 = por %p171, %p172
      %p174 = scmp.ne.s32.totalorder %s160, %s161
      %p175 = scmp.eq.s32.totalorder %s31, 1
      %p176 = por %p174, %p175
      %p178 = scmp.ne.s32.totalorder %s161, %s177
      %p179 = scmp.eq.s32.totalorder %s31, 0
      %p180 = por %p178, %p179
      %s181 = ssub.s32 %s32, %s44
      %s182 = ssub.s32 %s33, %s40
      %s183 = sor.u32 %s181, %s182
      %p184 = scmp.eq.s32.totalorder %s183, 0
      %s186 = sadd.s32 %s185, 1
      %s187 = scalar_select %p184, %s185, %s186
      %p190 = pneg %p184
      %p191 = scmp.eq.s32.totalorder %s25, 1
      %p192 = por %p190, %p191
      %p193 = scmp.ne.s32.totalorder %s185, %s188
      %p194 = scmp.eq.s32.totalorder %s25, 0
      %p195 = por %p193, %p194
      %p196 = scmp.ne.s32.totalorder %s185, %s188
      %p197 = scmp.eq.s32.totalorder %s30, 1
      %p198 = por %p196, %p197
      %p199 = scmp.ne.s32.totalorder %s188, %s189
      %p200 = scmp.eq.s32.totalorder %s30, 0
      %p201 = por %p199, %p200
      %p202 = scmp.ne.s32.totalorder %s188, %s189
      %p203 = scmp.eq.s32.totalorder %s31, 1
      %p204 = por %p202, %p203
      %p206 = scmp.ne.s32.totalorder %s189, %s205
      %p207 = scmp.eq.s32.totalorder %s31, 0
      %p208 = por %p206, %p207
      %s209 = ssub.s32 %s32, %s44
      %s210 = ssub.s32 %s33, %s40
      %s211 = sor.u32 %s209, %s210
      %p212 = scmp.eq.s32.totalorder %s211, 0
      %s214 = sadd.s32 %s213, 1
      %s215 = scalar_select %p212, %s213, %s214
      %p218 = pneg %p212
      %p219 = scmp.eq.s32.totalorder %s25, 1
      %p220 = por %p218, %p219
      %p221 = scmp.ne.s32.totalorder %s213, %s216
      %p222 = scmp.eq.s32.totalorder %s25, 0
      %p223 = por %p221, %p222
      %p224 = scmp.ne.s32.totalorder %s213, %s216
      %p225 = scmp.eq.s32.totalorder %s30, 1
      %p226 = por %p224, %p225
      %p227 = scmp.ne.s32.totalorder %s216, %s217
      %p228 = scmp.eq.s32.totalorder %s30, 0
      %p229 = por %p227, %p228
      %p230 = scmp.ne.s32.totalorder %s216, %s217
      %p231 = scmp.eq.s32.totalorder %s31, 1
      %p232 = por %p230, %p231
      %p234 = scmp.ne.s32.totalorder %s217, %s233
      %p235 = scmp.eq.s32.totalorder %s31, 0
      %p236 = por %p234, %p235
      %p237 = scmp.le.s32.totalorder 1, %s25
      %p238 = scmp.lt.s32.totalorder %s25, 3
      %p239 = pnand %p237, %p238
      %p240 = pneg %p239
      // Predicated region
      $region9: #{tpu_custom_call.1} parent=5 // pred_check
        _
      $region10: #{tpu_custom_call.1} parent=5 // pred_check_branch
        %242 = sbr.rel (%p239) target = $region12
      $region11: #{tpu_custom_call.1} parent=5 // pred_region
        %s243 = ssub.s32 %s25, 1
      $region12: #{tpu_custom_call.1} parent=5 // pred_fallthru
        _
      %p244 = scmp.lt.s32.totalorder %s25, 2
      // Predicated region
      $region13: #{tpu_custom_call.1} parent=5 // pred_check
        %p245 = pneg %p244
      $region14: #{tpu_custom_call.1} parent=5 // pred_check_branch
        %247 = sbr.rel (%p245) target = $region16
      $region15: #{tpu_custom_call.1} parent=5 // pred_region
        // Predicated region
        $region17: #{tpu_custom_call.1} parent=15 // pred_check
          %p248 = pneg %p59
        $region18: #{tpu_custom_call.1} parent=15 // pred_check_branch
          %250 = sbr.rel (%p248) target = $region20
        $region19: #{tpu_custom_call.1} parent=15 // pred_region
          %p251 = scmp.lt.s32.totalorder %s32, 1
          %s252 = scalar_select %p251, %s32, 1
          %p253 = scmp.lt.s32.totalorder %s33, 0
          %s254 = scalar_select %p253, %s33, 0
          %s255 = sadd.s32 %s254, %s252
          %s256 = smul.addr %s255, 8
          %s257 = scalar_lea.vmem %s0, %s256
        $region20: #{tpu_custom_call.1} parent=15 // pred_fallthru
          _
        // Predicated region
        $region21: #{tpu_custom_call.1} parent=15 // pred_check
          %p258 = pneg %p85
        $region22: #{tpu_custom_call.1} parent=15 // pred_check_branch
          %260 = sbr.rel (%p258) target = $region24
        $region23: #{tpu_custom_call.1} parent=15 // pred_region
          %s261 = sand.u32 %s75, 1
          %s262 = scalar_lea.sflag [#allocation3], %s261
          %s263 = sand.u32 %s75, 1
          %s264 = smul.addr %s263, 8
          %s265 = scalar_lea.vmem [#allocation2], %s264
          %267 = vsyncadd %s262, 0
          %s268 = smul.addr %s32, 8
          %s269 = scalar_lea.hbm %s1, %s268
          %s271 = sshll.u32 %s269, 4
          %s272 = int_to_ptr.hbm [resolvable:$true] %s271
          %s273 = sshll.u32 %s265, 4
          %s274 = int_to_ptr.vmem [resolvable:$true] %s273
          %276 = dma.hbm_to_vmem [thread:$0]  %s272, 128, %s274, %s262
        $region24: #{tpu_custom_call.1} parent=15 // pred_fallthru
          _
        // Predicated region
        $region25: #{tpu_custom_call.1} parent=15 // pred_check
          %p277 = pneg %p111
        $region26: #{tpu_custom_call.1} parent=15 // pred_check_branch
          %279 = sbr.rel (%p277) target = $region28
        $region27: #{tpu_custom_call.1} parent=15 // pred_region
          %s280 = sand.u32 %s101, 1
          %s281 = scalar_lea.sflag [#allocation6], %s280
          %s282 = sand.u32 %s101, 1
          %s283 = smul.addr %s282, 8
          %s284 = scalar_lea.vmem [#allocation5], %s283
          %286 = vsyncadd %s281, 0
          %s287 = smul.addr %s32, 8
          %s288 = scalar_lea.hbm %s2, %s287
          %s290 = sshll.u32 %s288, 4
          %s291 = int_to_ptr.hbm [resolvable:$true] %s290
          %s292 = sshll.u32 %s284, 4
          %s293 = int_to_ptr.vmem [resolvable:$true] %s292
          %295 = dma.hbm_to_vmem [thread:$0]  %s291, 128, %s293, %s281
        $region28: #{tpu_custom_call.1} parent=15 // pred_fallthru
          _
        // Predicated region
        $region29: #{tpu_custom_call.1} parent=15 // pred_check
          %p296 = pneg %p139
        $region30: #{tpu_custom_call.1} parent=15 // pred_check_branch
          %298 = sbr.rel (%p296) target = $region32
        $region31: #{tpu_custom_call.1} parent=15 // pred_region
          %p299 = scmp.lt.s32.totalorder %s32, 1
          %s300 = scalar_select %p299, %s32, 1
          %p301 = scmp.lt.s32.totalorder %s33, 0
          %s302 = scalar_select %p301, %s33, 0
          %s303 = sadd.s32 %s302, %s300
          %s304 = smul.addr %s303, 8
          %s305 = scalar_lea.vmem %s3, %s304
        $region32: #{tpu_custom_call.1} parent=15 // pred_fallthru
          _
      $region16: #{tpu_custom_call.1} parent=5 // pred_fallthru
        _
      %p306 = scmp.le.s32.totalorder 1, %s25
      %p307 = scmp.lt.s32.totalorder %s25, 3
      %p308 = pnand %p306, %p307
      %p309 = pneg %p308
      // Predicated region
      $region33: #{tpu_custom_call.1} parent=5 // pred_check
        _
      $region34: #{tpu_custom_call.1} parent=5 // pred_check_branch
        %311 = sbr.rel (%p308) target = $region36
      $region35: #{tpu_custom_call.1} parent=5 // pred_region
        %s312 = ssub.s32 %s25, 1
        %s313 = sand.u32 %s78, 1
        %s314 = scalar_lea.sflag [#allocation3], %s313
        %s315 = sand.u32 %s78, 1
        %s316 = smul.addr %s315, 8
        %s317 = scalar_lea.vmem [#allocation2], %s316
        // Predicated region
        $region37: #{tpu_custom_call.1} parent=35 // pred_check
          %p318 = pneg %p91
        $region38: #{tpu_custom_call.1} parent=35 // pred_check_branch
          %320 = sbr.rel (%p318) target = $region40
        $region39: #{tpu_custom_call.1} parent=35 // pred_region
          %322 = dma.done %s314, 128
        $region40: #{tpu_custom_call.1} parent=35 // pred_fallthru
          _
        %s323 = sand.u32 %s104, 1
        %s324 = scalar_lea.sflag [#allocation6], %s323
        %s325 = sand.u32 %s104, 1
        %s326 = smul.addr %s325, 8
        %s327 = scalar_lea.vmem [#allocation5], %s326
        // Predicated region
        $region41: #{tpu_custom_call.1} parent=35 // pred_check
          %p328 = pneg %p117
        $region42: #{tpu_custom_call.1} parent=35 // pred_check_branch
          %330 = sbr.rel (%p328) target = $region44
        $region43: #{tpu_custom_call.1} parent=35 // pred_region
          %332 = dma.done %s324, 128
        $region44: #{tpu_custom_call.1} parent=35 // pred_fallthru
          _
        %p333 = scmp.lt.s32.totalorder %s34, 1
        %s334 = scalar_select %p333, %s34, 1
        %p335 = scmp.lt.s32.totalorder %s35, 0
        %s336 = scalar_select %p335, %s35, 0
        %s337 = sadd.s32 %s336, %s334
        %s338 = smul.addr %s337, 8
        %s339 = scalar_lea.vmem %s0, %s338
        %p340 = pneg %p65
        %p341 = pneg %p62
        %s342 = sand.u32 %s78, 1
        %s343 = scalar_lea.sflag [#allocation3], %s342
        %s344 = sand.u32 %s78, 1
        %s345 = smul.addr %s344, 8
        %s346 = scalar_lea.vmem [#allocation2], %s345
        %p347 = pneg %p91
        %p348 = pneg %p88
        %s349 = sand.u32 %s104, 1
        %s350 = scalar_lea.sflag [#allocation6], %s349
        %s351 = sand.u32 %s104, 1
        %s352 = smul.addr %s351, 8
        %s353 = scalar_lea.vmem [#allocation5], %s352
        %p354 = pneg %p117
        %p355 = pneg %p114
        %p356 = scmp.lt.s32.totalorder %s34, 1
        %s357 = scalar_select %p356, %s34, 1
        %p358 = scmp.lt.s32.totalorder %s35, 0
        %s359 = scalar_select %p358, %s35, 0
        %s360 = sadd.s32 %s359, %s357
        %s361 = smul.addr %s360, 8
        %s362 = scalar_lea.vmem %s3, %s361
        %p363 = pneg %p145
        %p364 = pneg %p142
        %p365 = pneg %p173
        %p366 = pneg %p170
        %s367 = sand.u32 %s160, 1
        %s368 = scalar_lea.sflag [#allocation4], %s367
        %s369 = sand.u32 %s160, 1
        %s370 = smul.addr %s369, 8
        %s371 = scalar_lea.vmem [#allocation7], %s370
        %p372 = pneg %p201
        %p373 = pneg %p198
        %s374 = sand.u32 %s30, 1
        %s375 = scalar_lea.sflag [#allocation9], %s374
        %s376 = sand.u32 %s188, 1
        %s377 = smul.addr %s376, 32
        %s378 = scalar_lea.vmem [#allocation8], %s377
        %p379 = pneg %p229
        %p380 = pneg %p226
        %s381 = sand.u32 %s30, 1
        %s382 = scalar_lea.sflag [#allocation9], %s381
        %s383 = sand.u32 %s216, 1
        %s384 = smul.addr %s383, 32
        %s385 = scalar_lea.vmem [#allocation10], %s384
        %p386 = scmp.lt.s32.totalorder %s34, 1
        %s387 = scalar_select %p386, %s34, 1
        %p388 = scmp.lt.s32.totalorder %s35, 0
        %s389 = scalar_select %p388, %s35, 0
        %s390 = sadd.s32 %s389, %s387
        %s391 = smul.addr %s390, 8
        %s392 = scalar_lea.vmem %s0, %s391
        %p393 = scmp.lt.s32.totalorder %s34, 1
        %s394 = scalar_select %p393, %s34, 1
        %p395 = scmp.lt.s32.totalorder %s35, 0
        %s396 = scalar_select %p395, %s35, 0
        %s397 = sadd.s32 %s396, %s394
        %s398 = smul.addr %s397, 8
        %s399 = scalar_lea.vmem %s3, %s398
        %s401 = smul.u32 %s35, 8
        %v402 = vlaneseq
        %v403 = vshrl.u32 %v402, 7
        %v404 = vstv %s401
        %v405 = vadd.s32 %v404, %v403
        %v406 = vlaneseq
        %v407 = vand.u32 %v406, 127
        %v408 = vsub.s32 %v405, %v407
        %v409 = vcvt.s32.f32 %v408
        %v410 = vmul.f32 %v409, %v409
        %vm411 = vcmp.gt.s32.totalorder %v407, %v405
        %v412 = vld [vmem:[%s392] sm:$0xff]
        %v413 = vpack.c.bf16 %v412, %v412
        %v414 = vld [vmem:[%s317] sm:$0xff]
        %v415 = vpack.c.bf16 %v414, %v414
        %v416 = vld [vmem:[%s327] sm:$0xff]
        %v417 = vpack.c.bf16 %v416, %v416
        %vm418 = vcmask 261120
        %v420 = vsel %vm418, %v413, 0
        %v423 = vsel %vm418, %v415, 0
        %425 = vmatpush.bf16.xpose.msra.mxu0 0
        %426 = vmatpush.bf16.xpose.msra.mxu0 0
        %427 = vmatpush.bf16.xpose.msra.mxu0 0
        %428 = vmatpush.bf16.xpose.msra.mxu0 0
        %429 = vmatpush.bf16.xpose.msra.mxu0 0
        %430 = vmatpush.bf16.xpose.msra.mxu0 0
        %431 = vmatpush.bf16.xpose.msra.mxu0 0
        %432 = vmatpush.bf16.xpose.msra.mxu0 %v423
        %433 = vmatmul.bf16.gmra.mxu0 %v420
        %v434 = vpop.f32.mrf.mxu0
        %v435 = vadd.f32 0.0, %v434
        %v436 = vpop.f32.mrf.mxu0
        %437 = vdwg.mxu0
        %v438 = vsel %vm411, -inf, %v435
        %v439 = vmul.f32 %v438, 0.17677669
        %vm440 = vcmask 64512
        %v441 = vsel %vm440, %v439, -inf
        %442 = vmax.xlane.f32.xlu0 %v441
        %v443 = vpop.xlane.xlu0 %442
        %v444 = vsub.f32 %v439, %v443
        %v445 = vmul.f32 %v444, 1.442695
        %v446 = vpow.pop %v445
        %v447 = vsel %vm440, %v446, 0.0
        %448 = vadd.xlane.f32.xlu0 %v447
        %v449 = vpop.xlane.xlu0 %448
        %v450 = vrcp.pop %v449
        %v451 = vmul.f32 %v449, %v450
        %v452 = vsub.f32 1.0, %v451
        %v453 = vmul.f32 %v450, %v452
        %v454 = vadd.f32 %v450, %v453
        %vm455 = vweird.f32 %v449
        %vm456 = vweird.f32 %v450
        %vm457 = vmor %vm455, %vm456
        %v458 = vsel %vm457, %v450, %v454
        %v459 = vand.u32 2147483647, %v449
        %vm460 = vcmp.eq.f32.partialorder %v459, 8.507059e+37
        %v461 = vand.u32 %v449, 2147483648
        %v462 = vor.u32 1.1754944e-38, %v461
        %v463 = vsel %vm460, %v462, %v458
        %v464 = vmul.f32 1.0, %v463
        %v465 = vmul.f32 %v446, %v464
        %v466 = vpack.c.bf16 %v465, %v465
        %v468 = vsel %vm440, %v466, 0
        %vm470 = vcmask 1043456
        %v472 = vsel %vm470, %v417, 0
        %474 = vmatpush.bf16.msra.mxu0 0
        %475 = vmatpush.bf16.msra.mxu0 0
        %476 = vmatpush.bf16.msra.mxu0 0
        %477 = vmatpush.bf16.msra.mxu0 0
        %478 = vmatpush.bf16.msra.mxu0 0
        %479 = vmatpush.bf16.msra.mxu0 0
        %480 = vmatpush.bf16.msra.mxu0 0
        %481 = vmatpush.bf16.msra.mxu0 %v472
        %482 = vmatmul.bf16.gmra.mxu0 %v468
        %v483 = vpop.f32.mrf.mxu0
        %v484 = vadd.f32 0.0, %v483
        %v485 = vpop.f32.mrf.mxu0
        %486 = vdwg.mxu0
        %v487 = vld [vmem:[%s399] sm:$0xff]
        %v488 = vrcp.pop %v487
        %v489 = vmul.f32 %v487, %v488
        %v490 = vsub.f32 1.0, %v489
        %v491 = vmul.f32 %v488, %v490
        %v492 = vadd.f32 %v488, %v491
        %vm493 = vweird.f32 %v487
        %vm494 = vweird.f32 %v488
        %vm495 = vmor %vm493, %vm494
        %v496 = vsel %vm495, %v488, %v492
        %v497 = vand.u32 2147483647, %v487
        %vm498 = vcmp.eq.f32.partialorder %v497, 8.507059e+37
        %v499 = vand.u32 %v487, 2147483648
        %v500 = vor.u32 1.1754944e-38, %v499
        %v501 = vsel %vm498, %v500, %v496
        %v502 = vmul.f32 1.0, %v501
        %v503 = vmul.f32 %v502, 0.3989423
        %v504 = vmul.f32 %v410, -0.5
        %v505 = vmul.f32 %v502, %v502
        %507 = vset.pattern.permute.xlu0 0
        %508 = vperm.xlu0 %507, %v505
        %v509 = vpop.permute.xlu0 %508
        %v511 = vmul.f32 %v504, %v509
        %v512 = vmul.f32 %v511, 1.442695
        %v513 = vpow.pop %v512
        %515 = vset.pattern.permute.xlu0 0
        %516 = vperm.xlu0 %515, %v503
        %v517 = vpop.permute.xlu0 %516
        %v519 = vmul.f32 %v517, %v513
        %520 = vst.msk [vmem:[%s378] sm:$0xff] %vm440, %v465
        %521 = vst.msk [vmem:[%s385] sm:$0xff] %vm440, %v519
        %v522 = vld [vmem:[%s392] sm:$0xff]
        %v523 = vpack.c.bf16 %v522, %v522
        %v524 = vld [vmem:[%s317] sm:$0xff]
        %v525 = vpack.c.bf16 %v524, %v524
        %v526 = vld [vmem:[%s327] sm:$0xff]
        %v527 = vpack.c.bf16 %v526, %v526
        %529 = vrot.lane.b32.xlu0 %v523, 96
        %v530 = vpop.permute.xlu0 %529
        %532 = vrot.lane.b32.xlu0 %v525, 96
        %v533 = vpop.permute.xlu0 %532
        %v535 = vsel %vm418, %v530, 0
        %v538 = vsel %vm418, %v533, 0
        %540 = vmatpush.bf16.xpose.msra.mxu0 0
        %541 = vmatpush.bf16.xpose.msra.mxu0 0
        %542 = vmatpush.bf16.xpose.msra.mxu0 0
        %543 = vmatpush.bf16.xpose.msra.mxu0 0
        %544 = vmatpush.bf16.xpose.msra.mxu0 0
        %545 = vmatpush.bf16.xpose.msra.mxu0 0
        %546 = vmatpush.bf16.xpose.msra.mxu0 0
        %547 = vmatpush.bf16.xpose.msra.mxu0 %v538
        %548 = vmatmul.bf16.gmra.mxu0 %v535
        %v549 = vpop.f32.mrf.mxu0
        %v550 = vadd.f32 0.0, %v549
        %v551 = vpop.f32.mrf.mxu0
        %552 = vdwg.mxu0
        %v553 = vsel %vm411, -inf, %v550
        %v554 = vmul.f32 %v553, 0.17677669
        %v555 = vsel %vm440, %v554, -inf
        %556 = vmax.xlane.f32.xlu0 %v555
        %v557 = vpop.xlane.xlu0 %556
        %v558 = vsub.f32 %v554, %v557
        %v559 = vmul.f32 %v558, 1.442695
        %v560 = vpow.pop %v559
        %v561 = vsel %vm440, %v560, 0.0
        %562 = vadd.xlane.f32.xlu0 %v561
        %v563 = vpop.xlane.xlu0 %562
        %v564 = vrcp.pop %v563
        %v565 = vmul.f32 %v563, %v564
        %v566 = vsub.f32 1.0, %v565
        %v567 = vmul.f32 %v564, %v566
        %v568 = vadd.f32 %v564, %v567
        %vm569 = vweird.f32 %v563
        %vm570 = vweird.f32 %v564
        %vm571 = vmor %vm569, %vm570
        %v572 = vsel %vm571, %v564, %v568
        %v573 = vand.u32 2147483647, %v563
        %vm574 = vcmp.eq.f32.partialorder %v573, 8.507059e+37
        %v575 = vand.u32 %v563, 2147483648
        %v576 = vor.u32 1.1754944e-38, %v575
        %v577 = vsel %vm574, %v576, %v572
        %v578 = vmul.f32 1.0, %v577
        %v579 = vmul.f32 %v560, %v578
        %v580 = vpack.c.bf16 %v579, %v579
        %582 = vrot.lane.b32.xlu0 %v527, 96
        %v583 = vpop.permute.xlu0 %582
        %v585 = vsel %vm440, %v580, 0
        %v588 = vsel %vm470, %v583, 0
        %590 = vmatpush.bf16.msra.mxu0 0
        %591 = vmatpush.bf16.msra.mxu0 0
        %592 = vmatpush.bf16.msra.mxu0 0
        %593 = vmatpush.bf16.msra.mxu0 0
        %594 = vmatpush.bf16.msra.mxu0 0
        %595 = vmatpush.bf16.msra.mxu0 0
        %596 = vmatpush.bf16.msra.mxu0 0
        %597 = vmatpush.bf16.msra.mxu0 %v588
        %598 = vmatmul.bf16.gmra.mxu0 %v585
        %v599 = vpop.f32.mrf.mxu0
        %v600 = vadd.f32 0.0, %v599
        %v601 = vpop.f32.mrf.mxu0
        %602 = vdwg.mxu0
        %v603 = vld [vmem:[%s399] sm:$0xff]
        %v604 = vrcp.pop %v603
        %v605 = vmul.f32 %v603, %v604
        %v606 = vsub.f32 1.0, %v605
        %v607 = vmul.f32 %v604, %v606
        %v608 = vadd.f32 %v604, %v607
        %vm609 = vweird.f32 %v603
        %vm610 = vweird.f32 %v604
        %vm611 = vmor %vm609, %vm610
        %v612 = vsel %vm611, %v604, %v608
        %v613 = vand.u32 2147483647, %v603
        %vm614 = vcmp.eq.f32.partialorder %v613, 8.507059e+37
        %v615 = vand.u32 %v603, 2147483648
        %v616 = vor.u32 1.1754944e-38, %v615
        %v617 = vsel %vm614, %v616, %v612
        %v618 = vmul.f32 1.0, %v617
        %v619 = vmul.f32 %v618, 0.3989423
        %v620 = vmul.f32 %v618, %v618
        %622 = vset.pattern.permute.xlu0 1
        %623 = vperm.xlu0 %622, %v620
        %v624 = vpop.permute.xlu0 %623
        %v626 = vmul.f32 %v504, %v624
        %v627 = vmul.f32 %v626, 1.442695
        %v628 = vpow.pop %v627
        %630 = vset.pattern.permute.xlu0 1
        %631 = vperm.xlu0 %630, %v619
        %v632 = vpop.permute.xlu0 %631
        %v634 = vmul.f32 %v632, %v628
        %s635 = scalar_lea.vmem %s378, 8 [#allocation8]
        %636 = vst.msk [vmem:[%s635] sm:$0xff] %vm440, %v579
        %s637 = scalar_lea.vmem %s385, 8 [#allocation10]
        %638 = vst.msk [vmem:[%s637] sm:$0xff] %vm440, %v634
        %v639 = vld [vmem:[%s392] sm:$0xff]
        %v640 = vpack.c.bf16 %v639, %v639
        %v641 = vld [vmem:[%s317] sm:$0xff]
        %v642 = vpack.c.bf16 %v641, %v641
        %v643 = vld [vmem:[%s327] sm:$0xff]
        %v644 = vpack.c.bf16 %v643, %v643
        %646 = vrot.lane.b32.xlu0 %v640, 64
        %v647 = vpop.permute.xlu0 %646
        %649 = vrot.lane.b32.xlu0 %v642, 64
        %v650 = vpop.permute.xlu0 %649
        %v652 = vsel %vm418, %v647, 0
        %v655 = vsel %vm418, %v650, 0
        %657 = vmatpush.bf16.xpose.msra.mxu0 0
        %658 = vmatpush.bf16.xpose.msra.mxu0 0
        %659 = vmatpush.bf16.xpose.msra.mxu0 0
        %660 = vmatpush.bf16.xpose.msra.mxu0 0
        %661 = vmatpush.bf16.xpose.msra.mxu0 0
        %662 = vmatpush.bf16.xpose.msra.mxu0 0
        %663 = vmatpush.bf16.xpose.msra.mxu0 0
        %664 = vmatpush.bf16.xpose.msra.mxu0 %v655
        %665 = vmatmul.bf16.gmra.mxu0 %v652
        %v666 = vpop.f32.mrf.mxu0
        %v667 = vadd.f32 0.0, %v666
        %v668 = vpop.f32.mrf.mxu0
        %669 = vdwg.mxu0
        %v670 = vsel %vm411, -inf, %v667
        %v671 = vmul.f32 %v670, 0.17677669
        %v672 = vsel %vm440, %v671, -inf
        %673 = vmax.xlane.f32.xlu0 %v672
        %v674 = vpop.xlane.xlu0 %673
        %v675 = vsub.f32 %v671, %v674
        %v676 = vmul.f32 %v675, 1.442695
        %v677 = vpow.pop %v676
        %v678 = vsel %vm440, %v677, 0.0
        %679 = vadd.xlane.f32.xlu0 %v678
        %v680 = vpop.xlane.xlu0 %679
        %v681 = vrcp.pop %v680
        %v682 = vmul.f32 %v680, %v681
        %v683 = vsub.f32 1.0, %v682
        %v684 = vmul.f32 %v681, %v683
        %v685 = vadd.f32 %v681, %v684
        %vm686 = vweird.f32 %v680
        %vm687 = vweird.f32 %v681
        %vm688 = vmor %vm686, %vm687
        %v689 = vsel %vm688, %v681, %v685
        %v690 = vand.u32 2147483647, %v680
        %vm691 = vcmp.eq.f32.partialorder %v690, 8.507059e+37
        %v692 = vand.u32 %v680, 2147483648
        %v693 = vor.u32 1.1754944e-38, %v692
        %v694 = vsel %vm691, %v693, %v689
        %v695 = vmul.f32 1.0, %v694
        %v696 = vmul.f32 %v677, %v695
        %v697 = vpack.c.bf16 %v696, %v696
        %699 = vrot.lane.b32.xlu0 %v644, 64
        %v700 = vpop.permute.xlu0 %699
        %v702 = vsel %vm440, %v697, 0
        %v705 = vsel %vm470, %v700, 0
        %707 = vmatpush.bf16.msra.mxu0 0
        %708 = vmatpush.bf16.msra.mxu0 0
        %709 = vmatpush.bf16.msra.mxu0 0
        %710 = vmatpush.bf16.msra.mxu0 0
        %711 = vmatpush.bf16.msra.mxu0 0
        %712 = vmatpush.bf16.msra.mxu0 0
        %713 = vmatpush.bf16.msra.mxu0 0
        %714 = vmatpush.bf16.msra.mxu0 %v705
        %715 = vmatmul.bf16.gmra.mxu0 %v702
        %v716 = vpop.f32.mrf.mxu0
        %v717 = vadd.f32 0.0, %v716
        %v718 = vpop.f32.mrf.mxu0
        %719 = vdwg.mxu0
        %v720 = vld [vmem:[%s399] sm:$0xff]
        %v721 = vrcp.pop %v720
        %v722 = vmul.f32 %v720, %v721
        %v723 = vsub.f32 1.0, %v722
        %v724 = vmul.f32 %v721, %v723
        %v725 = vadd.f32 %v721, %v724
        %vm726 = vweird.f32 %v720
        %vm727 = vweird.f32 %v721
        %vm728 = vmor %vm726, %vm727
        %v729 = vsel %vm728, %v721, %v725
        %v730 = vand.u32 2147483647, %v720
        %vm731 = vcmp.eq.f32.partialorder %v730, 8.507059e+37
        %v732 = vand.u32 %v720, 2147483648
        %v733 = vor.u32 1.1754944e-38, %v732
        %v734 = vsel %vm731, %v733, %v729
        %v735 = vmul.f32 1.0, %v734
        %v736 = vmul.f32 %v735, 0.3989423
        %v737 = vmul.f32 %v735, %v735
        %739 = vset.pattern.permute.xlu0 2
        %740 = vperm.xlu0 %739, %v737
        %v741 = vpop.permute.xlu0 %740
        %v743 = vmul.f32 %v504, %v741
        %v744 = vmul.f32 %v743, 1.442695
        %v745 = vpow.pop %v744
        %747 = vset.pattern.permute.xlu0 2
        %748 = vperm.xlu0 %747, %v736
        %v749 = vpop.permute.xlu0 %748
        %v751 = vmul.f32 %v749, %v745
        %s752 = scalar_lea.vmem %s378, 16 [#allocation8]
        %753 = vst.msk [vmem:[%s752] sm:$0xff] %vm440, %v696
        %s754 = scalar_lea.vmem %s385, 16 [#allocation10]
        %755 = vst.msk [vmem:[%s754] sm:$0xff] %vm440, %v751
        %v756 = vld [vmem:[%s392] sm:$0xff]
        %v757 = vpack.c.bf16 %v756, %v756
        %v758 = vld [vmem:[%s317] sm:$0xff]
        %v759 = vpack.c.bf16 %v758, %v758
        %v760 = vld [vmem:[%s327] sm:$0xff]
        %v761 = vpack.c.bf16 %v760, %v760
        %763 = vrot.lane.b32.xlu0 %v757, 32
        %v764 = vpop.permute.xlu0 %763
        %766 = vrot.lane.b32.xlu0 %v759, 32
        %v767 = vpop.permute.xlu0 %766
        %v769 = vsel %vm418, %v764, 0
        %v772 = vsel %vm418, %v767, 0
        %774 = vmatpush.bf16.xpose.msra.mxu0 0
        %775 = vmatpush.bf16.xpose.msra.mxu0 0
        %776 = vmatpush.bf16.xpose.msra.mxu0 0
        %777 = vmatpush.bf16.xpose.msra.mxu0 0
        %778 = vmatpush.bf16.xpose.msra.mxu0 0
        %779 = vmatpush.bf16.xpose.msra.mxu0 0
        %780 = vmatpush.bf16.xpose.msra.mxu0 0
        %781 = vmatpush.bf16.xpose.msra.mxu0 %v772
        %782 = vmatmul.bf16.gmra.mxu0 %v769
        %v783 = vpop.f32.mrf.mxu0
        %v784 = vadd.f32 0.0, %v783
        %v785 = vpop.f32.mrf.mxu0
        %786 = vdwg.mxu0
        %v787 = vsel %vm411, -inf, %v784
        %v788 = vmul.f32 %v787, 0.17677669
        %v789 = vsel %vm440, %v788, -inf
        %790 = vmax.xlane.f32.xlu0 %v789
        %v791 = vpop.xlane.xlu0 %790
        %v792 = vsub.f32 %v788, %v791
        %v793 = vmul.f32 %v792, 1.442695
        %v794 = vpow.pop %v793
        %v795 = vsel %vm440, %v794, 0.0
        %796 = vadd.xlane.f32.xlu0 %v795
        %v797 = vpop.xlane.xlu0 %796
        %v798 = vrcp.pop %v797
        %v799 = vmul.f32 %v797, %v798
        %v800 = vsub.f32 1.0, %v799
        %v801 = vmul.f32 %v798, %v800
        %v802 = vadd.f32 %v798, %v801
        %vm803 = vweird.f32 %v797
        %vm804 = vweird.f32 %v798
        %vm805 = vmor %vm803, %vm804
        %v806 = vsel %vm805, %v798, %v802
        %v807 = vand.u32 2147483647, %v797
        %vm808 = vcmp.eq.f32.partialorder %v807, 8.507059e+37
        %v809 = vand.u32 %v797, 2147483648
        %v810 = vor.u32 1.1754944e-38, %v809
        %v811 = vsel %vm808, %v810, %v806
        %v812 = vmul.f32 1.0, %v811
        %v813 = vmul.f32 %v794, %v812
        %v814 = vpack.c.bf16 %v813, %v813
        %816 = vrot.lane.b32.xlu0 %v761, 32
        %v817 = vpop.permute.xlu0 %816
        %v819 = vsel %vm440, %v814, 0
        %v822 = vsel %vm470, %v817, 0
        %824 = vmatpush.bf16.msra.mxu0 0
        %825 = vmatpush.bf16.msra.mxu0 0
        %826 = vmatpush.bf16.msra.mxu0 0
        %827 = vmatpush.bf16.msra.mxu0 0
        %828 = vmatpush.bf16.msra.mxu0 0
        %829 = vmatpush.bf16.msra.mxu0 0
        %830 = vmatpush.bf16.msra.mxu0 0
        %831 = vmatpush.bf16.msra.mxu0 %v822
        %832 = vmatmul.bf16.gmra.mxu0 %v819
        %v833 = vpop.f32.mrf.mxu0
        %v834 = vadd.f32 0.0, %v833
        %v835 = vpop.f32.mrf.mxu0
        %836 = vdwg.mxu0
        %838 = vrot.lane.b32.xlu0 %v600, 32
        %v839 = vpop.permute.xlu0 %838
        %842 = vrot.lane.b32.xlu0 %v717, 64
        %v843 = vpop.permute.xlu0 %842
        %846 = vrot.lane.b32.xlu0 %v834, 96
        %v847 = vpop.permute.xlu0 %846
        %v849 = vsel %vm418, %v484, %v839
        %vm850 = vcmask 523264
        %v851 = vsel %vm850, %v849, %v843
        %vm852 = vcmask 785408
        %v853 = vsel %vm852, %v851, %v847
        %854 = vst [vmem:[%s371] sm:$0xff] %v853
        %v855 = vld [vmem:[%s399] sm:$0xff]
        %v856 = vrcp.pop %v855
        %v857 = vmul.f32 %v855, %v856
        %v858 = vsub.f32 1.0, %v857
        %v859 = vmul.f32 %v856, %v858
        %v860 = vadd.f32 %v856, %v859
        %vm861 = vweird.f32 %v855
        %vm862 = vweird.f32 %v856
        %vm863 = vmor %vm861, %vm862
        %v864 = vsel %vm863, %v856, %v860
        %v865 = vand.u32 2147483647, %v855
        %vm866 = vcmp.eq.f32.partialorder %v865, 8.507059e+37
        %v867 = vand.u32 %v855, 2147483648
        %v868 = vor.u32 1.1754944e-38, %v867
        %v869 = vsel %vm866, %v868, %v864
        %v870 = vmul.f32 1.0, %v869
        %v871 = vmul.f32 %v870, 0.3989423
        %v872 = vmul.f32 %v870, %v870
        %874 = vset.pattern.permute.xlu0 3
        %875 = vperm.xlu0 %874, %v872
        %v876 = vpop.permute.xlu0 %875
        %v878 = vmul.f32 %v504, %v876
        %v879 = vmul.f32 %v878, 1.442695
        %v880 = vpow.pop %v879
        %882 = vset.pattern.permute.xlu0 3
        %883 = vperm.xlu0 %882, %v871
        %v884 = vpop.permute.xlu0 %883
        %v886 = vmul.f32 %v884, %v880
        %s887 = scalar_lea.vmem %s378, 24 [#allocation8]
        %888 = vst.msk [vmem:[%s887] sm:$0xff] %vm440, %v813
        %s889 = scalar_lea.vmem %s385, 24 [#allocation10]
        %890 = vst.msk [vmem:[%s889] sm:$0xff] %vm440, %v886
        %s891 = sand.u32 %s160, 1
        %s892 = scalar_lea.sflag [#allocation4], %s891
        %s893 = sand.u32 %s160, 1
        %s894 = smul.addr %s893, 8
        %s895 = scalar_lea.vmem [#allocation7], %s894
        %s896 = sand.u32 %s30, 1
        %s897 = scalar_lea.sflag [#allocation9], %s896
        %s898 = sand.u32 %s188, 1
        %s899 = smul.addr %s898, 32
        %s900 = scalar_lea.vmem [#allocation8], %s899
        %s901 = sand.u32 %s30, 1
        %s902 = scalar_lea.sflag [#allocation9], %s901
        %s903 = sand.u32 %s216, 1
        %s904 = smul.addr %s903, 32
        %s905 = scalar_lea.vmem [#allocation10], %s904
        // Predicated region
        $region45: #{tpu_custom_call.1} parent=35 // pred_check
          %p906 = pneg %p170
        $region46: #{tpu_custom_call.1} parent=35 // pred_check_branch
          %908 = sbr.rel (%p906) target = $region48
        $region47: #{tpu_custom_call.1} parent=35 // pred_region
          %910 = vsyncadd %s892, 0
          %s911 = sadd.s32 %s35, %s34
          %s912 = smul.addr %s911, 8
          %s913 = scalar_lea.hbm %s4, %s912
          %s915 = sshll.u32 %s895, 4
          %s916 = int_to_ptr.vmem [resolvable:$true] %s915
          %s917 = sshll.u32 %s913, 4
          %s918 = int_to_ptr.hbm [resolvable:$true] %s917
          %920 = dma.vmem_to_hbm [thread:$0]  %s916, 128, %s918, %s892
        $region48: #{tpu_custom_call.1} parent=35 // pred_fallthru
          _
        // Predicated region
        $region49: #{tpu_custom_call.1} parent=35 // pred_check
          %p921 = pneg %p198
        $region50: #{tpu_custom_call.1} parent=35 // pred_check_branch
          %923 = sbr.rel (%p921) target = $region52
        $region51: #{tpu_custom_call.1} parent=35 // pred_region
          %925 = vsyncadd %s897, 0
          %s926 = smul.addr %s34, 4
          %s927 = sadd.s32 %s35, %s926
          %s928 = smul.addr %s927, 8
          %s929 = scalar_lea.hbm %s5, %s928
          %s930 = sshll.u32 %s900, 4
          %s931 = int_to_ptr.vmem [resolvable:$true] %s930
          %s932 = sshll.u32 %s929, 4
          %s933 = int_to_ptr.hbm [resolvable:$true] %s932
          %938 = dma.vmem_to_hbm [thread:$0]  %s931, 512, %s933, %s897, 128, 128, 8
        $region52: #{tpu_custom_call.1} parent=35 // pred_fallthru
          _
        // Predicated region
        $region53: #{tpu_custom_call.1} parent=35 // pred_check
          %p939 = pneg %p226
        $region54: #{tpu_custom_call.1} parent=35 // pred_check_branch
          %941 = sbr.rel (%p939) target = $region56
        $region55: #{tpu_custom_call.1} parent=35 // pred_region
          %943 = vsyncadd %s902, 0
          %s944 = smul.addr %s34, 4
          %s945 = sadd.s32 %s35, %s944
          %s946 = smul.addr %s945, 8
          %s947 = scalar_lea.hbm %s6, %s946
          %s948 = sshll.u32 %s905, 4
          %s949 = int_to_ptr.vmem [resolvable:$true] %s948
          %s950 = sshll.u32 %s947, 4
          %s951 = int_to_ptr.hbm [resolvable:$true] %s950
          %956 = dma.vmem_to_hbm [thread:$0]  %s949, 512, %s951, %s902, 128, 128, 8
        $region56: #{tpu_custom_call.1} parent=35 // pred_fallthru
          _
      $region36: #{tpu_custom_call.1} parent=5 // pred_fallthru
        _
      %p957 = scmp.le.s32.totalorder 2, %s25
      // Predicated region
      $region57: #{tpu_custom_call.1} parent=5 // pred_check
        %p958 = pneg %p957
      $region58: #{tpu_custom_call.1} parent=5 // pred_check_branch
        %960 = sbr.rel (%p958) target = $region60
      $region59: #{tpu_custom_call.1} parent=5 // pred_region
        %s961 = ssub.s32 %s25, 2
        // Predicated region
        $region61: #{tpu_custom_call.1} parent=59 // pred_check
          %p962 = pneg %p176
        $region62: #{tpu_custom_call.1} parent=59 // pred_check_branch
          %964 = sbr.rel (%p962) target = $region64
        $region63: #{tpu_custom_call.1} parent=59 // pred_region
          %s965 = sand.u32 %s161, 1
          %s966 = scalar_lea.sflag [#allocation4], %s965
          %s967 = sand.u32 %s161, 1
          %s968 = smul.addr %s967, 8
          %s969 = scalar_lea.vmem [#allocation7], %s968
          %971 = dma.done %s966, 128
        $region64: #{tpu_custom_call.1} parent=59 // pred_fallthru
          _
        // Predicated region
        $region65: #{tpu_custom_call.1} parent=59 // pred_check
          %p972 = pneg %p204
        $region66: #{tpu_custom_call.1} parent=59 // pred_check_branch
          %974 = sbr.rel (%p972) target = $region68
        $region67: #{tpu_custom_call.1} parent=59 // pred_region
          %s975 = sand.u32 %s31, 1
          %s976 = scalar_lea.sflag [#allocation9], %s975
          %s977 = sand.u32 %s189, 1
          %s978 = smul.addr %s977, 32
          %s979 = scalar_lea.vmem [#allocation8], %s978
          %981 = dma.done %s976, 512
        $region68: #{tpu_custom_call.1} parent=59 // pred_fallthru
          _
        // Predicated region
        $region69: #{tpu_custom_call.1} parent=59 // pred_check
          %p982 = pneg %p232
        $region70: #{tpu_custom_call.1} parent=59 // pred_check_branch
          %984 = sbr.rel (%p982) target = $region72
        $region71: #{tpu_custom_call.1} parent=59 // pred_region
          %s985 = sand.u32 %s31, 1
          %s986 = scalar_lea.sflag [#allocation9], %s985
          %s987 = sand.u32 %s217, 1
          %s988 = smul.addr %s987, 32
          %s989 = scalar_lea.vmem [#allocation10], %s988
          %991 = dma.done %s986, 512
        $region72: #{tpu_custom_call.1} parent=59 // pred_fallthru
          _
      $region60: #{tpu_custom_call.1} parent=5 // pred_fallthru
        _
    $region6: #{tpu_custom_call.1} parent=1 // loop_footer
      %s29 = sadd.s32 1, %s25
    $region7: #{tpu_custom_call.1} parent=1 // loop_footer_branch
      %24 = sbr.rel target = $region3
    $region8: #{tpu_custom_call.1} parent=1 // loop_exit
      _
    %992 = vsyncpa [#allocation3], 1
    %s993 = scalar_lea.sflag [#allocation3], 1
    %994 = vsyncpa %s993, 1
    %995 = vsyncpa [#allocation6], 1
    %s996 = scalar_lea.sflag [#allocation6], 1
    %997 = vsyncpa %s996, 1
    %998 = vsyncpa [#allocation4], 1
    %s999 = scalar_lea.sflag [#allocation4], 1
    %1000 = vsyncpa %s999, 1
    %1001 = vsyncpa [#allocation9], 1
    %s1002 = scalar_lea.sflag [#allocation9], 1
    %1003 = vsyncpa %s1002, 1

</llo_original>
